<compile_context>
chip_gen: v6e
topology: v6e:2x2x1
jax: 0.10.0
libtpu: 0.0.40
codegen_flags: <defaults>
</compile_context>

<pallas_src>
import functools
import math

import jax
import jax.numpy as jnp
from jax import lax
from jax.experimental import pallas as pl
from jax.experimental.pallas import tpu as pltpu

_LANE = 128
_SUBLANE = 8


def _round_up(x, m):
    return (x + m - 1) // m * m


def _pad2(a, rows, cols):
    return jnp.pad(a, ((0, rows - a.shape[0]), (0, cols - a.shape[1])))


def _mm(a, b):
    """MXU matmul: bf16 inputs, f32 accumulation."""
    return jnp.dot(a.astype(jnp.bfloat16), b.astype(jnp.bfloat16),
                   preferred_element_type=jnp.float32)


def _mm_tlhs(a, b):
    """a.T @ b on the MXU (contract dim 0 of both operands)."""
    return lax.dot_general(a.astype(jnp.bfloat16), b.astype(jnp.bfloat16),
                           dimension_numbers=(((0,), (0,)), ((), ())),
                           preferred_element_type=jnp.float32)


# ----------------------------------------------------------------------------
# Fused kernel: one grid step == one DGCN layer.
# ----------------------------------------------------------------------------
def _gnn_kernel(ufea_ref, vfea_ref, uv_ref,
                w1_ref, b1_ref, w2_ref, b2_ref,
                w3_ref, b3_ref, w4_ref, b4_ref,
                wdu_ref, bdu_ref, wpu_ref, bpu_ref,
                drug_ref, prot_ref, *, alpha, feat_dim, pack_union):
    # Layer 0: initialise the carried state.  (Inputs are HBM-aliased with the
    # outputs, but output VMEM blocks are never pre-loaded, so this single
    # VMEM copy at layer 0 is still required.)
    @pl.when(pl.program_id(0) == 0)
    def _():
        drug_ref[...] = ufea_ref[...]
        prot_ref[...] = vfea_ref[...]

    def gcn(x, adj, trans, w_ref, b_ref):
        # LeakyReLU(A @ (x @ W) + b) with A = adj.T if trans else adj.
        # Re-associate to (A @ x) @ W when the output node count is smaller
        # than the input node count (fewer rows through the K=128 contraction).
        out_rows = adj.shape[1] if trans else adj.shape[0]
        agg = _mm_tlhs if trans else _mm
        if out_rows < x.shape[0]:
            h = _mm(agg(adj, x), w_ref[...])          # (A @ x) @ W
        else:
            h = agg(adj, _mm(x, w_ref[...]))          # A @ (x @ W)
        h = h + b_ref[...]
        return jnp.where(h > 0, h, alpha * h)

    def union(ho, fea, w_ref, b_ref):
        # relu(cat(ho, fea) @ W + b)
        if pack_union:
            # 2*F <= 128: pack fea into lanes F..2F-1 (padding lanes are zero)
            # and do one K=128 dot against the packed [FP, FP] weight.
            packed = ho + pltpu.roll(fea, shift=feat_dim, axis=1)
            h = _mm(packed, w_ref[...]) + b_ref[...]
        else:
            fp = fea.shape[1]
            h = _mm(ho, w_ref[:fp, :]) + _mm(fea, w_ref[fp:, :]) + b_ref[...]
        return jnp.maximum(h, 0.0)

    ufea = drug_ref[...]          # [NdP, FP] f32 carry (learn_drug)
    vfea = prot_ref[...]          # [NpP, FP] f32 carry (learn_protein)
    uv = uv_ref[...]              # [NdP, NpP] bf16 (UV_adj; VU_adj == uv.T)

    drug_ho = gcn(ufea, uv, True, w1_ref, b1_ref)       # gc1: [NpP, HP]
    prot_ho = gcn(vfea, uv, False, w2_ref, b2_ref)      # gc2: [NdP, HP]
    drug_ho = gcn(drug_ho, uv, False, w3_ref, b3_ref)   # gc3: [NdP, FP]
    prot_ho = gcn(prot_ho, uv, True, w4_ref, b4_ref)    # gc4: [NpP, FP]

    drug_ref[...] = union(drug_ho, ufea, wdu_ref, bdu_ref)   # [NdP, FP]
    prot_ref[...] = union(prot_ho, vfea, wpu_ref, bpu_ref)   # [NpP, FP]


# ----------------------------------------------------------------------------
# Parameters (padded + stacked along the layer axis; weights in bf16).
# ----------------------------------------------------------------------------
def init_gnn_params(key, opt):
    F, H, L = opt["feature_dim"], opt["hidden_dim"], opt["GNN"]
    FP, HP = _round_up(F, _LANE), _round_up(H, _LANE)
    pack_union = (2 * F <= FP)
    UP = FP if pack_union else 2 * FP

    def linear(k, fi, fo, fip, fop):
        kw, kb = jax.random.split(k)
        bound = 1.0 / math.sqrt(fi)                  # torch nn.Linear init
        w = jax.random.uniform(kw, (fi, fo), jnp.float32, -bound, bound)
        b = jax.random.uniform(kb, (1, fo), jnp.float32, -bound, bound)
        return _pad2(w, fip, fop), _pad2(b, 1, fop)

    def union_linear(k):
        kw, kb = jax.random.split(k)
        bound = 1.0 / math.sqrt(2 * F)
        w = jax.random.uniform(kw, (2 * F, F), jnp.float32, -bound, bound)
        b = jax.random.uniform(kb, (1, F), jnp.float32, -bound, bound)
        wp = jnp.zeros((UP, FP), jnp.float32)
        if pack_union:
            wp = wp.at[:2 * F, :F].set(w)            # rows 0..F-1: ho, F..2F-1: fea
        else:
            wp = wp.at[:F, :F].set(w[:F]).at[FP:FP + F, :F].set(w[F:])
        return wp, _pad2(b, 1, FP)

    names = ["w1", "b1", "w2", "b2", "w3", "b3", "w4", "b4",
             "wdu", "bdu", "wpu", "bpu"]
    stacks = {n: [] for n in names}
    for _ in range(L):
        key, k1, k2, k3, k4, k5, k6 = jax.random.split(key, 7)
        w1, b1 = linear(k1, F, H, FP, HP)
        w2, b2 = linear(k2, F, H, FP, HP)
        w3, b3 = linear(k3, H, F, HP, FP)
        w4, b4 = linear(k4, H, F, HP, FP)
        wdu, bdu = union_linear(k5)
        wpu, bpu = union_linear(k6)
        for n, v in zip(names, (w1, b1, w2, b2, w3, b3, w4, b4,
                                wdu, bdu, wpu, bpu)):
            stacks[n].append(v)

    params = {}
    for n, vs in stacks.items():
        stacked = jnp.stack(vs, axis=0)
        # Weights feed the MXU in bf16; biases stay f32 (added to f32 acc).
        params[n] = stacked.astype(jnp.bfloat16) if n.startswith("w") else stacked
    # TODO(synk): score_function1/2 exist in __init__ but are unused in forward.
    return params


# ----------------------------------------------------------------------------
# Forward: pad, single pallas_call over all layers, slice back.
# ----------------------------------------------------------------------------
@functools.partial(jax.jit, static_argnames=("alpha",))
def gnn_forward(params, ufea, vfea, UV_adj, VU_adj, adj, *, alpha):
    del adj      # unused by the PyTorch forward; dropout is identity in eval.
    del VU_adj   # TODO(synk): assumed == UV_adj.T (bipartite graph); realized
                 # in-kernel via a transposed-LHS matmul to halve adjacency
                 # HBM/VMEM traffic.  Kept in the signature for API parity.

    Nd, F = ufea.shape
    Np = vfea.shape[0]
    L, FP, HP = params["w1"].shape
    UP = params["wdu"].shape[1]
    pack_union = (UP == FP)

    # Lane-dense layout: Np is the lane dim of the adjacency -> pad to 128;
    # Nd only appears as sublane / contraction dims -> pad to 8.
    NdP = _round_up(Nd, _SUBLANE)
    NpP = _round_up(Np, _LANE)

    ufea_p = _pad2(ufea.astype(jnp.float32), NdP, FP)
    vfea_p = _pad2(vfea.astype(jnp.float32), NpP, FP)
    uv_p = _pad2(UV_adj, NdP, NpP).astype(jnp.bfloat16)   # 0/1 exact in bf16

    def full(shape):
        return pl.BlockSpec(shape, lambda l: (0,) * len(shape))

    def per_layer(shape):
        return pl.BlockSpec((None,) + shape, lambda l: (l,) + (0,) * len(shape))

    in_specs = [
        full((NdP, FP)), full((NpP, FP)), full((NdP, NpP)),
        per_layer((FP, HP)), per_layer((1, HP)),      # gc1
        per_layer((FP, HP)), per_layer((1, HP)),      # gc2
        per_layer((HP, FP)), per_layer((1, FP)),      # gc3
        per_layer((HP, FP)), per_layer((1, FP)),      # gc4
        per_layer((UP, FP)), per_layer((1, FP)),      # drug_union
        per_layer((UP, FP)), per_layer((1, FP)),      # protein_union
    ]
    out_specs = [full((NdP, FP)), full((NpP, FP))]

    def gcn_flops(n_in, n_out, f_in, f_out):
        if n_out < n_in:                       # (A @ x) @ W
            return 2 * (n_out * n_in * f_in + n_out * f_in * f_out)
        return 2 * (n_in * f_in * f_out + n_out * n_in * f_out)

    flops = L * (gcn_flops(NdP, NpP, FP, HP) + gcn_flops(NpP, NdP, FP, HP)
                 + gcn_flops(NpP, NdP, HP, FP) + gcn_flops(NdP, NpP, HP, FP)
                 + 2 * (NdP + NpP) * UP * FP)
    bytes_accessed = ((ufea_p.size + vfea_p.size) * 4 + uv_p.size * 2
                      + sum(int(v.size) * v.dtype.itemsize
                            for v in params.values())
                      + (NdP + NpP) * FP * 4)
    cost = pl.CostEstimate(flops=int(flops), transcendentals=0,
                           bytes_accessed=int(bytes_accessed))

    drug_p, prot_p = pl.pallas_call(
        functools.partial(_gnn_kernel, alpha=alpha, feat_dim=F,
                          pack_union=pack_union),
        out_shape=(jax.ShapeDtypeStruct((NdP, FP), jnp.float32),
                   jax.ShapeDtypeStruct((NpP, FP), jnp.float32)),
        grid_spec=pltpu.PrefetchScalarGridSpec(
            num_scalar_prefetch=0,
            grid=(L,),
            in_specs=in_specs,
            out_specs=out_specs,
        ),
        input_output_aliases={0: 0, 1: 1},    # donate padded ufea/vfea (P8)
        compiler_params=pltpu.CompilerParams(
            dimension_semantics=("arbitrary",),
            vmem_limit_bytes=64 * 1024 * 1024),
        cost_estimate=cost,
    )(ufea_p, vfea_p, uv_p,
      params["w1"], params["b1"], params["w2"], params["b2"],
      params["w3"], params["b3"], params["w4"], params["b4"],
      params["wdu"], params["bdu"], params["wpu"], params["bpu"])

    return drug_p[:Nd, :F], prot_p[:Np, :F]


# ----------------------------------------------------------------------------
# Pure-JAX reference (eval mode: dropout == identity), same bf16 weights.
# ----------------------------------------------------------------------------
def gnn_reference(params, ufea, vfea, UV_adj, VU_adj, alpha, F, H):
    L, FP, _ = params["w1"].shape
    pack_union = params["wdu"].shape[1] == FP

    def leaky(h):
        return jnp.where(h > 0, h, alpha * h)

    def union_w(name, l):
        w = params[name][l].astype(jnp.float32)
        if pack_union:
            return w[:2 * F, :F]
        return jnp.concatenate([w[:F, :F], w[FP:FP + F, :F]], axis=0)

    drug, prot = ufea, vfea
    for l in range(L):
        w1 = params["w1"][l, :F, :H].astype(jnp.float32)
        w2 = params["w2"][l, :F, :H].astype(jnp.float32)
        w3 = params["w3"][l, :H, :F].astype(jnp.float32)
        w4 = params["w4"][l, :H, :F].astype(jnp.float32)
        b1, b2 = params["b1"][l, 0, :H], params["b2"][l, 0, :H]
        b3, b4 = params["b3"][l, 0, :F], params["b4"][l, 0, :F]
        wdu, bdu = union_w("wdu", l), params["bdu"][l, 0, :F]
        wpu, bpu = union_w("wpu", l), params["bpu"][l, 0, :F]

        drug_ho = leaky(VU_adj @ (drug @ w1) + b1)
        prot_ho = leaky(UV_adj @ (prot @ w2) + b2)
        drug_ho = leaky(UV_adj @ (drug_ho @ w3) + b3)
        prot_ho = leaky(VU_adj @ (prot_ho @ w4) + b4)
        drug = jax.nn.relu(jnp.concatenate([drug_ho, drug], axis=1) @ wdu + bdu)
        prot = jax.nn.relu(jnp.concatenate([prot_ho, prot], axis=1) @ wpu + bpu)
    return drug, prot


# ----------------------------------------------------------------------------
# Demo
# ----------------------------------------------------------------------------
if __name__ == "__main__":
    opt = dict(feature_dim=32, hidden_dim=16, dropout=0.1, leakey=0.2, GNN=2)
    Nd, Np = 8, 16  # drugs, proteins

    key = jax.random.PRNGKey(0)
    k_p, k_u, k_v, k_uv = jax.random.split(key, 4)

    params = init_gnn_params(k_p, opt)

    ufea = jax.random.normal(k_u, (Nd, opt["feature_dim"]), jnp.float32)
    vfea = jax.random.normal(k_v, (Np, opt["feature_dim"]), jnp.float32)
    UV_adj = (jax.random.uniform(k_uv, (Nd, Np)) < 0.3).astype(jnp.float32)
    VU_adj = UV_adj.T                                   # [Np, Nd]
    adj = jnp.zeros((Nd + Np, Nd + Np), jnp.float32)    # unused by forward

    drug, protein = gnn_forward(params, ufea, vfea, UV_adj, VU_adj, adj,
                                alpha=opt["leakey"])
    jax.block_until_ready((drug, protein))

    assert drug.shape == (Nd, opt["feature_dim"])
    assert protein.shape == (Np, opt["feature_dim"])

    # Numerical check vs. the pure-JAX reference (loose tol: bf16 MXU inputs).
    ref_d, ref_p = gnn_reference(params, ufea, vfea, UV_adj, VU_adj,
                                 opt["leakey"], opt["feature_dim"],
                                 opt["hidden_dim"])
    for got, ref in ((drug, ref_d), (protein, ref_p)):
        err = jnp.max(jnp.abs(got - ref)) / (jnp.max(jnp.abs(ref)) + 1e-6)
        assert float(err) < 5e-2, f"kernel/reference mismatch: rel err {float(err)}"

    print("KERNEL_OK")
</pallas_src>

<mosaic_0001>
module attributes {stable_mosaic.version = 11 : i64} {
  func.func @_gnn_kernel(%arg0: i32, %arg1: memref<8x128xf32, #tpu.memory_space<vmem>>, %arg2: memref<128x128xf32, #tpu.memory_space<vmem>>, %arg3: memref<8x128xbf16, #tpu.memory_space<vmem>>, %arg4: memref<1x128x128xbf16, #tpu.memory_space<vmem>>, %arg5: memref<1x1x128xf32, #tpu.memory_space<vmem>>, %arg6: memref<1x128x128xbf16, #tpu.memory_space<vmem>>, %arg7: memref<1x1x128xf32, #tpu.memory_space<vmem>>, %arg8: memref<1x128x128xbf16, #tpu.memory_space<vmem>>, %arg9: memref<1x1x128xf32, #tpu.memory_space<vmem>>, %arg10: memref<1x128x128xbf16, #tpu.memory_space<vmem>>, %arg11: memref<1x1x128xf32, #tpu.memory_space<vmem>>, %arg12: memref<1x128x128xbf16, #tpu.memory_space<vmem>>, %arg13: memref<1x1x128xf32, #tpu.memory_space<vmem>>, %arg14: memref<1x128x128xbf16, #tpu.memory_space<vmem>>, %arg15: memref<1x1x128xf32, #tpu.memory_space<vmem>>, %arg16: memref<8x128xf32, #tpu.memory_space<vmem>>, %arg17: memref<128x128xf32, #tpu.memory_space<vmem>>) attributes {dimension_semantics = [#tpu.dimension_semantics<arbitrary>], iteration_bounds = array<i64: 2>, scalar_prefetch = 0 : i64, scratch_operands = 0 : i64, tpu.core_type = #tpu.core_type<tc>, window_params = [{pipeline_mode = #tpu.pipeline_mode<synchronous>, transform_indices = @transform_0, window_bounds = array<i64: 8, 128>}, {pipeline_mode = #tpu.pipeline_mode<synchronous>, transform_indices = @transform_1, window_bounds = array<i64: 128, 128>}, {pipeline_mode = #tpu.pipeline_mode<synchronous>, transform_indices = @transform_2, window_bounds = array<i64: 8, 128>}, {transform_indices = @transform_3, window_bounds = array<i64: 1, 128, 128>}, {transform_indices = @transform_4, window_bounds = array<i64: 1, 1, 128>}, {transform_indices = @transform_5, window_bounds = array<i64: 1, 128, 128>}, {transform_indices = @transform_6, window_bounds = array<i64: 1, 1, 128>}, {transform_indices = @transform_7, window_bounds = array<i64: 1, 128, 128>}, {transform_indices = @transform_8, window_bounds = array<i64: 1, 1, 128>}, {transform_indices = @transform_9, window_bounds = array<i64: 1, 128, 128>}, {transform_indices = @transform_10, window_bounds = array<i64: 1, 1, 128>}, {transform_indices = @transform_11, window_bounds = array<i64: 1, 128, 128>}, {transform_indices = @transform_12, window_bounds = array<i64: 1, 1, 128>}, {transform_indices = @transform_13, window_bounds = array<i64: 1, 128, 128>}, {transform_indices = @transform_14, window_bounds = array<i64: 1, 1, 128>}, {pipeline_mode = #tpu.pipeline_mode<synchronous>, transform_indices = @transform_15, window_bounds = array<i64: 8, 128>}, {pipeline_mode = #tpu.pipeline_mode<synchronous>, transform_indices = @transform_16, window_bounds = array<i64: 128, 128>}]} {
    %c0_i32 = arith.constant 0 : i32
    %0 = arith.cmpi eq, %arg0, %c0_i32 : i32
    %1 = arith.extui %0 : i1 to i32
    %c0_i32_0 = arith.constant 0 : i32
    %2 = arith.cmpi ne, %1, %c0_i32_0 : i32
    scf.if %2 {
      %c0_66 = arith.constant 0 : index
      %c0_67 = arith.constant 0 : index
      %92 = vector.load %arg1[%c0_66, %c0_67] : memref<8x128xf32, #tpu.memory_space<vmem>>, vector<8x128xf32>
      %c0_68 = arith.constant 0 : index
      %c0_69 = arith.constant 0 : index
      %93 = vector.load %arg16[%c0_68, %c0_69] : memref<8x128xf32, #tpu.memory_space<vmem>>, vector<8x128xf32>
      tpu.vector_store %arg16[%c0_68, %c0_69], %92 {strides = array<i32>} : memref<8x128xf32, #tpu.memory_space<vmem>>, vector<8x128xf32>,
      %c0_70 = arith.constant 0 : index
      %c0_71 = arith.constant 0 : index
      %94 = vector.load %arg2[%c0_70, %c0_71] : memref<128x128xf32, #tpu.memory_space<vmem>>, vector<128x128xf32>
      %c0_72 = arith.constant 0 : index
      %c0_73 = arith.constant 0 : index
      %95 = vector.load %arg17[%c0_72, %c0_73] : memref<128x128xf32, #tpu.memory_space<vmem>>, vector<128x128xf32>
      tpu.vector_store %arg17[%c0_72, %c0_73], %94 {strides = array<i32>} : memref<128x128xf32, #tpu.memory_space<vmem>>, vector<128x128xf32>,
    } else {
    }
    %c0 = arith.constant 0 : index
    %c0_1 = arith.constant 0 : index
    %3 = vector.load %arg16[%c0, %c0_1] : memref<8x128xf32, #tpu.memory_space<vmem>>, vector<8x128xf32>
    %c0_2 = arith.constant 0 : index
    %c0_3 = arith.constant 0 : index
    %4 = vector.load %arg17[%c0_2, %c0_3] : memref<128x128xf32, #tpu.memory_space<vmem>>, vector<128x128xf32>
    %c0_4 = arith.constant 0 : index
    %c0_5 = arith.constant 0 : index
    %5 = vector.load %arg3[%c0_4, %c0_5] : memref<8x128xbf16, #tpu.memory_space<vmem>>, vector<8x128xbf16>
    %c0_6 = arith.constant 0 : index
    %c0_7 = arith.constant 0 : index
    %c0_8 = arith.constant 0 : index
    %6 = vector.load %arg4[%c0_6, %c0_7, %c0_8] : memref<1x128x128xbf16, #tpu.memory_space<vmem>>, vector<1x128x128xbf16>
    %7 = vector.shape_cast %6 : vector<1x128x128xbf16> to vector<128x128xbf16>
    %8 = arith.truncf %3 : vector<8x128xf32> to vector<8x128xbf16>
    %cst = arith.constant dense<0.000000e+00> : vector<8x128xf32>
    %9 = tpu.matmul %8, %7, %cst {dimension_numbers = #tpu.dot_dimension_numbers<[1], [0], [0], [1], [0, 0, 1, 1], [], []>} : vector<8x128xbf16>, vector<128x128xbf16>, vector<8x128xf32> -> vector<8x128xf32>
    %10 = arith.truncf %9 : vector<8x128xf32> to vector<8x128xbf16>
    %cst_9 = arith.constant dense<0.000000e+00> : vector<128x128xf32>
    %11 = tpu.matmul %5, %10, %cst_9 {dimension_numbers = #tpu.dot_dimension_numbers<[0], [0], [1], [1], [0, 1, 1, 1], [], []>} : vector<8x128xbf16>, vector<8x128xbf16>, vector<128x128xf32> -> vector<128x128xf32>
    %c0_10 = arith.constant 0 : index
    %c0_11 = arith.constant 0 : index
    %c0_12 = arith.constant 0 : index
    %12 = vector.load %arg5[%c0_10, %c0_11, %c0_12] : memref<1x1x128xf32, #tpu.memory_space<vmem>>, vector<1x1x128xf32>
    %13 = vector.shape_cast %12 : vector<1x1x128xf32> to vector<1x128xf32>
    %14 = vector.broadcast %13 : vector<1x128xf32> to vector<128x128xf32>
    %15 = arith.addf %11, %14 : vector<128x128xf32>
    %cst_13 = arith.constant 0.000000e+00 : f32
    %16 = vector.broadcast %cst_13 : f32 to vector<128x128xf32>
    %17 = arith.cmpf ogt, %15, %16 : vector<128x128xf32>
    %cst_14 = arith.constant 2.000000e-01 : f32
    %18 = vector.broadcast %cst_14 : f32 to vector<128x128xf32>
    %19 = arith.mulf %18, %15 : vector<128x128xf32>
    %20 = arith.select %17, %15, %19 : vector<128x128xi1>, vector<128x128xf32>
    %21 = arith.truncf %4 : vector<128x128xf32> to vector<128x128xbf16>
    %cst_15 = arith.constant dense<0.000000e+00> : vector<8x128xf32>
    %22 = tpu.matmul %5, %21, %cst_15 {dimension_numbers = #tpu.dot_dimension_numbers<[1], [0], [0], [1], [0, 0, 1, 1], [], []>} : vector<8x128xbf16>, vector<128x128xbf16>, vector<8x128xf32> -> vector<8x128xf32>
    %c0_16 = arith.constant 0 : index
    %c0_17 = arith.constant 0 : index
    %c0_18 = arith.constant 0 : index
    %23 = vector.load %arg6[%c0_16, %c0_17, %c0_18] : memref<1x128x128xbf16, #tpu.memory_space<vmem>>, vector<1x128x128xbf16>
    %24 = vector.shape_cast %23 : vector<1x128x128xbf16> to vector<128x128xbf16>
    %25 = arith.truncf %22 : vector<8x128xf32> to vector<8x128xbf16>
    %cst_19 = arith.constant dense<0.000000e+00> : vector<8x128xf32>
    %26 = tpu.matmul %25, %24, %cst_19 {dimension_numbers = #tpu.dot_dimension_numbers<[1], [0], [0], [1], [0, 0, 1, 1], [], []>} : vector<8x128xbf16>, vector<128x128xbf16>, vector<8x128xf32> -> vector<8x128xf32>
    %c0_20 = arith.constant 0 : index
    %c0_21 = arith.constant 0 : index
    %c0_22 = arith.constant 0 : index
    %27 = vector.load %arg7[%c0_20, %c0_21, %c0_22] : memref<1x1x128xf32, #tpu.memory_space<vmem>>, vector<1x1x128xf32>
    %28 = vector.shape_cast %27 : vector<1x1x128xf32> to vector<1x128xf32>
    %29 = vector.broadcast %28 : vector<1x128xf32> to vector<8x128xf32>
    %30 = arith.addf %26, %29 : vector<8x128xf32>
    %cst_23 = arith.constant 0.000000e+00 : f32
    %31 = vector.broadcast %cst_23 : f32 to vector<8x128xf32>
    %32 = arith.cmpf ogt, %30, %31 : vector<8x128xf32>
    %cst_24 = arith.constant 2.000000e-01 : f32
    %33 = vector.broadcast %cst_24 : f32 to vector<8x128xf32>
    %34 = arith.mulf %33, %30 : vector<8x128xf32>
    %35 = arith.select %32, %30, %34 : vector<8x128xi1>, vector<8x128xf32>
    %36 = arith.truncf %20 : vector<128x128xf32> to vector<128x128xbf16>
    %cst_25 = arith.constant dense<0.000000e+00> : vector<8x128xf32>
    %37 = tpu.matmul %5, %36, %cst_25 {dimension_numbers = #tpu.dot_dimension_numbers<[1], [0], [0], [1], [0, 0, 1, 1], [], []>} : vector<8x128xbf16>, vector<128x128xbf16>, vector<8x128xf32> -> vector<8x128xf32>
    %c0_26 = arith.constant 0 : index
    %c0_27 = arith.constant 0 : index
    %c0_28 = arith.constant 0 : index
    %38 = vector.load %arg8[%c0_26, %c0_27, %c0_28] : memref<1x128x128xbf16, #tpu.memory_space<vmem>>, vector<1x128x128xbf16>
    %39 = vector.shape_cast %38 : vector<1x128x128xbf16> to vector<128x128xbf16>
    %40 = arith.truncf %37 : vector<8x128xf32> to vector<8x128xbf16>
    %cst_29 = arith.constant dense<0.000000e+00> : vector<8x128xf32>
    %41 = tpu.matmul %40, %39, %cst_29 {dimension_numbers = #tpu.dot_dimension_numbers<[1], [0], [0], [1], [0, 0, 1, 1], [], []>} : vector<8x128xbf16>, vector<128x128xbf16>, vector<8x128xf32> -> vector<8x128xf32>
    %c0_30 = arith.constant 0 : index
    %c0_31 = arith.constant 0 : index
    %c0_32 = arith.constant 0 : index
    %42 = vector.load %arg9[%c0_30, %c0_31, %c0_32] : memref<1x1x128xf32, #tpu.memory_space<vmem>>, vector<1x1x128xf32>
    %43 = vector.shape_cast %42 : vector<1x1x128xf32> to vector<1x128xf32>
    %44 = vector.broadcast %43 : vector<1x128xf32> to vector<8x128xf32>
    %45 = arith.addf %41, %44 : vector<8x128xf32>
    %cst_33 = arith.constant 0.000000e+00 : f32
    %46 = vector.broadcast %cst_33 : f32 to vector<8x128xf32>
    %47 = arith.cmpf ogt, %45, %46 : vector<8x128xf32>
    %cst_34 = arith.constant 2.000000e-01 : f32
    %48 = vector.broadcast %cst_34 : f32 to vector<8x128xf32>
    %49 = arith.mulf %48, %45 : vector<8x128xf32>
    %50 = arith.select %47, %45, %49 : vector<8x128xi1>, vector<8x128xf32>
    %c0_35 = arith.constant 0 : index
    %c0_36 = arith.constant 0 : index
    %c0_37 = arith.constant 0 : index
    %51 = vector.load %arg10[%c0_35, %c0_36, %c0_37] : memref<1x128x128xbf16, #tpu.memory_space<vmem>>, vector<1x128x128xbf16>
    %52 = vector.shape_cast %51 : vector<1x128x128xbf16> to vector<128x128xbf16>
    %53 = arith.truncf %35 : vector<8x128xf32> to vector<8x128xbf16>
    %cst_38 = arith.constant dense<0.000000e+00> : vector<8x128xf32>
    %54 = tpu.matmul %53, %52, %cst_38 {dimension_numbers = #tpu.dot_dimension_numbers<[1], [0], [0], [1], [0, 0, 1, 1], [], []>} : vector<8x128xbf16>, vector<128x128xbf16>, vector<8x128xf32> -> vector<8x128xf32>
    %55 = arith.truncf %54 : vector<8x128xf32> to vector<8x128xbf16>
    %cst_39 = arith.constant dense<0.000000e+00> : vector<128x128xf32>
    %56 = tpu.matmul %5, %55, %cst_39 {dimension_numbers = #tpu.dot_dimension_numbers<[0], [0], [1], [1], [0, 1, 1, 1], [], []>} : vector<8x128xbf16>, vector<8x128xbf16>, vector<128x128xf32> -> vector<128x128xf32>
    %c0_40 = arith.constant 0 : index
    %c0_41 = arith.constant 0 : index
    %c0_42 = arith.constant 0 : index
    %57 = vector.load %arg11[%c0_40, %c0_41, %c0_42] : memref<1x1x128xf32, #tpu.memory_space<vmem>>, vector<1x1x128xf32>
    %58 = vector.shape_cast %57 : vector<1x1x128xf32> to vector<1x128xf32>
    %59 = vector.broadcast %58 : vector<1x128xf32> to vector<128x128xf32>
    %60 = arith.addf %56, %59 : vector<128x128xf32>
    %cst_43 = arith.constant 0.000000e+00 : f32
    %61 = vector.broadcast %cst_43 : f32 to vector<128x128xf32>
    %62 = arith.cmpf ogt, %60, %61 : vector<128x128xf32>
    %cst_44 = arith.constant 2.000000e-01 : f32
    %63 = vector.broadcast %cst_44 : f32 to vector<128x128xf32>
    %64 = arith.mulf %63, %60 : vector<128x128xf32>
    %65 = arith.select %62, %60, %64 : vector<128x128xi1>, vector<128x128xf32>
    %c32_i32 = arith.constant 32 : i32
    %66 = tpu.dynamic_rotate %3 by %c32_i32 dim 1 : vector<8x128xf32>, i32 -> vector<8x128xf32>
    %67 = arith.addf %50, %66 : vector<8x128xf32>
    %c0_45 = arith.constant 0 : index
    %c0_46 = arith.constant 0 : index
    %c0_47 = arith.constant 0 : index
    %68 = vector.load %arg12[%c0_45, %c0_46, %c0_47] : memref<1x128x128xbf16, #tpu.memory_space<vmem>>, vector<1x128x128xbf16>
    %69 = vector.shape_cast %68 : vector<1x128x128xbf16> to vector<128x128xbf16>
    %70 = arith.truncf %67 : vector<8x128xf32> to vector<8x128xbf16>
    %cst_48 = arith.constant dense<0.000000e+00> : vector<8x128xf32>
    %71 = tpu.matmul %70, %69, %cst_48 {dimension_numbers = #tpu.dot_dimension_numbers<[1], [0], [0], [1], [0, 0, 1, 1], [], []>} : vector<8x128xbf16>, vector<128x128xbf16>, vector<8x128xf32> -> vector<8x128xf32>
    %c0_49 = arith.constant 0 : index
    %c0_50 = arith.constant 0 : index
    %c0_51 = arith.constant 0 : index
    %72 = vector.load %arg13[%c0_49, %c0_50, %c0_51] : memref<1x1x128xf32, #tpu.memory_space<vmem>>, vector<1x1x128xf32>
    %73 = vector.shape_cast %72 : vector<1x1x128xf32> to vector<1x128xf32>
    %74 = vector.broadcast %73 : vector<1x128xf32> to vector<8x128xf32>
    %75 = arith.addf %71, %74 : vector<8x128xf32>
    %cst_52 = arith.constant 0.000000e+00 : f32
    %76 = vector.broadcast %cst_52 : f32 to vector<8x128xf32>
    %77 = arith.maximumf %75, %76 : vector<8x128xf32>
    %c0_53 = arith.constant 0 : index
    %c0_54 = arith.constant 0 : index
    %78 = vector.load %arg16[%c0_53, %c0_54] : memref<8x128xf32, #tpu.memory_space<vmem>>, vector<8x128xf32>
    tpu.vector_store %arg16[%c0_53, %c0_54], %77 {strides = array<i32>} : memref<8x128xf32, #tpu.memory_space<vmem>>, vector<8x128xf32>,
    %c32_i32_55 = arith.constant 32 : i32
    %79 = tpu.dynamic_rotate %4 by %c32_i32_55 dim 1 : vector<128x128xf32>, i32 -> vector<128x128xf32>
    %80 = arith.addf %65, %79 : vector<128x128xf32>
    %c0_56 = arith.constant 0 : index
    %c0_57 = arith.constant 0 : index
    %c0_58 = arith.constant 0 : index
    %81 = vector.load %arg14[%c0_56, %c0_57, %c0_58] : memref<1x128x128xbf16, #tpu.memory_space<vmem>>, vector<1x128x128xbf16>
    %82 = vector.shape_cast %81 : vector<1x128x128xbf16> to vector<128x128xbf16>
    %83 = arith.truncf %80 : vector<128x128xf32> to vector<128x128xbf16>
    %cst_59 = arith.constant dense<0.000000e+00> : vector<128x128xf32>
    %84 = tpu.matmul %83, %82, %cst_59 {dimension_numbers = #tpu.dot_dimension_numbers<[1], [0], [0], [1], [0, 0, 1, 1], [], []>} : vector<128x128xbf16>, vector<128x128xbf16>, vector<128x128xf32> -> vector<128x128xf32>
    %c0_60 = arith.constant 0 : index
    %c0_61 = arith.constant 0 : index
    %c0_62 = arith.constant 0 : index
    %85 = vector.load %arg15[%c0_60, %c0_61, %c0_62] : memref<1x1x128xf32, #tpu.memory_space<vmem>>, vector<1x1x128xf32>
    %86 = vector.shape_cast %85 : vector<1x1x128xf32> to vector<1x128xf32>
    %87 = vector.broadcast %86 : vector<1x128xf32> to vector<128x128xf32>
    %88 = arith.addf %84, %87 : vector<128x128xf32>
    %cst_63 = arith.constant 0.000000e+00 : f32
    %89 = vector.broadcast %cst_63 : f32 to vector<128x128xf32>
    %90 = arith.maximumf %88, %89 : vector<128x128xf32>
    %c0_64 = arith.constant 0 : index
    %c0_65 = arith.constant 0 : index
    %91 = vector.load %arg17[%c0_64, %c0_65] : memref<128x128xf32, #tpu.memory_space<vmem>>, vector<128x128xf32>
    tpu.vector_store %arg17[%c0_64, %c0_65], %90 {strides = array<i32>} : memref<128x128xf32, #tpu.memory_space<vmem>>, vector<128x128xf32>,
    return
  }
  func.func @transform_0(%arg0: i32) -> (i32, i32) {
    %c0_i32 = arith.constant 0 : i32
    %c0_i32_0 = arith.constant 0 : i32
    %c0_i32_1 = arith.constant 0 : i32
    return %c0_i32, %c0_i32_0 : i32, i32
  }
  func.func @transform_1(%arg0: i32) -> (i32, i32) {
    %c0_i32 = arith.constant 0 : i32
    %c0_i32_0 = arith.constant 0 : i32
    %c0_i32_1 = arith.constant 0 : i32
    return %c0_i32, %c0_i32_0 : i32, i32
  }
  func.func @transform_2(%arg0: i32) -> (i32, i32) {
    %c0_i32 = arith.constant 0 : i32
    %c0_i32_0 = arith.constant 0 : i32
    %c0_i32_1 = arith.constant 0 : i32
    return %c0_i32, %c0_i32_0 : i32, i32
  }
  func.func @transform_3(%arg0: i32) -> (i32, i32, i32) {
    %c0_i32 = arith.constant 0 : i32
    %c0_i32_0 = arith.constant 0 : i32
    %c0_i32_1 = arith.constant 0 : i32
    return %arg0, %c0_i32, %c0_i32_0 : i32, i32, i32
  }
  func.func @transform_4(%arg0: i32) -> (i32, i32, i32) {
    %c0_i32 = arith.constant 0 : i32
    %c0_i32_0 = arith.constant 0 : i32
    %c0_i32_1 = arith.constant 0 : i32
    return %arg0, %c0_i32, %c0_i32_0 : i32, i32, i32
  }
  func.func @transform_5(%arg0: i32) -> (i32, i32, i32) {
    %c0_i32 = arith.constant 0 : i32
    %c0_i32_0 = arith.constant 0 : i32
    %c0_i32_1 = arith.constant 0 : i32
    return %arg0, %c0_i32, %c0_i32_0 : i32, i32, i32
  }
  func.func @transform_6(%arg0: i32) -> (i32, i32, i32) {
    %c0_i32 = arith.constant 0 : i32
    %c0_i32_0 = arith.constant 0 : i32
    %c0_i32_1 = arith.constant 0 : i32
    return %arg0, %c0_i32, %c0_i32_0 : i32, i32, i32
  }
  func.func @transform_7(%arg0: i32) -> (i32, i32, i32) {
    %c0_i32 = arith.constant 0 : i32
    %c0_i32_0 = arith.constant 0 : i32
    %c0_i32_1 = arith.constant 0 : i32
    return %arg0, %c0_i32, %c0_i32_0 : i32, i32, i32
  }
  func.func @transform_8(%arg0: i32) -> (i32, i32, i32) {
    %c0_i32 = arith.constant 0 : i32
    %c0_i32_0 = arith.constant 0 : i32
    %c0_i32_1 = arith.constant 0 : i32
    return %arg0, %c0_i32, %c0_i32_0 : i32, i32, i32
  }
  func.func @transform_9(%arg0: i32) -> (i32, i32, i32) {
    %c0_i32 = arith.constant 0 : i32
    %c0_i32_0 = arith.constant 0 : i32
    %c0_i32_1 = arith.constant 0 : i32
    return %arg0, %c0_i32, %c0_i32_0 : i32, i32, i32
  }
  func.func @transform_10(%arg0: i32) -> (i32, i32, i32) {
    %c0_i32 = arith.constant 0 : i32
    %c0_i32_0 = arith.constant 0 : i32
    %c0_i32_1 = arith.constant 0 : i32
    return %arg0, %c0_i32, %c0_i32_0 : i32, i32, i32
  }
  func.func @transform_11(%arg0: i32) -> (i32, i32, i32) {
    %c0_i32 = arith.constant 0 : i32
    %c0_i32_0 = arith.constant 0 : i32
    %c0_i32_1 = arith.constant 0 : i32
    return %arg0, %c0_i32, %c0_i32_0 : i32, i32, i32
  }
  func.func @transform_12(%arg0: i32) -> (i32, i32, i32) {
    %c0_i32 = arith.constant 0 : i32
    %c0_i32_0 = arith.constant 0 : i32
    %c0_i32_1 = arith.constant 0 : i32
    return %arg0, %c0_i32, %c0_i32_0 : i32, i32, i32
  }
  func.func @transform_13(%arg0: i32) -> (i32, i32, i32) {
    %c0_i32 = arith.constant 0 : i32
    %c0_i32_0 = arith.constant 0 : i32
    %c0_i32_1 = arith.constant 0 : i32
    return %arg0, %c0_i32, %c0_i32_0 : i32, i32, i32
  }
  func.func @transform_14(%arg0: i32) -> (i32, i32, i32) {
    %c0_i32 = arith.constant 0 : i32
    %c0_i32_0 = arith.constant 0 : i32
    %c0_i32_1 = arith.constant 0 : i32
    return %arg0, %c0_i32, %c0_i32_0 : i32, i32, i32
  }
  func.func @transform_15(%arg0: i32) -> (i32, i32) {
    %c0_i32 = arith.constant 0 : i32
    %c0_i32_0 = arith.constant 0 : i32
    %c0_i32_1 = arith.constant 0 : i32
    return %c0_i32, %c0_i32_0 : i32, i32
  }
  func.func @transform_16(%arg0: i32) -> (i32, i32) {
    %c0_i32 = arith.constant 0 : i32
    %c0_i32_0 = arith.constant 0 : i32
    %c0_i32_1 = arith.constant 0 : i32
    return %c0_i32, %c0_i32_0 : i32, i32
  }
}

</mosaic_0001>

<llo_original>
// kernel: gnn_forward.1
$region0: #{gnn_forward.1}
  #allocation0 [shape = 'u32[]', space=smem, size = 0x4, offset = 0x4, fixed_abs, tag = 'smem constant byte address 0x4 - core index']
  #allocation1 [shape = 'u32[144,128]{1,0:T(1,128)}', space=vmem, size = 0x12000, scoped, tag = 'internal scratch']
  %s0 = inlined_call_operand.vmem [shape: f32[8,128], index: 0, kind: input, shape index: {}, may-alias: {0,15}]
  %s1 = inlined_call_operand.vmem [shape: f32[128,128], index: 1, kind: input, shape index: {}, may-alias: {1,16}]
  %s2 = inlined_call_operand.vmem [shape: bf16[8,128], index: 2, kind: input, shape index: {}]
  %s3 = inlined_call_operand.vmem [shape: bf16[2,128,128], index: 3, kind: input, shape index: {}]
  %s4 = inlined_call_operand.vmem [shape: f32[2,1,128], index: 4, kind: input, shape index: {}]
  %s5 = inlined_call_operand.hbm [shape: bf16[2,128,128], index: 5, kind: input, shape index: {}]
  %s6 = inlined_call_operand.vmem [shape: f32[2,1,128], index: 6, kind: input, shape index: {}]
  %s7 = inlined_call_operand.hbm [shape: bf16[2,128,128], index: 7, kind: input, shape index: {}]
  %s8 = inlined_call_operand.vmem [shape: f32[2,1,128], index: 8, kind: input, shape index: {}]
  %s9 = inlined_call_operand.hbm [shape: bf16[2,128,128], index: 9, kind: input, shape index: {}]
  %s10 = inlined_call_operand.vmem [shape: f32[2,1,128], index: 10, kind: input, shape index: {}]
  %s11 = inlined_call_operand.hbm [shape: bf16[2,128,128], index: 11, kind: input, shape index: {}]
  %s12 = inlined_call_operand.vmem [shape: f32[2,1,128], index: 12, kind: input, shape index: {}]
  %s13 = inlined_call_operand.hbm [shape: bf16[2,128,128], index: 13, kind: input, shape index: {}]
  %s14 = inlined_call_operand.vmem [shape: f32[2,1,128], index: 14, kind: input, shape index: {}]
  %s15 = inlined_call_operand.vmem [shape: f32[8,128], index: 15, kind: output, shape index: {0}, may-alias: {0,15}]
  %s16 = inlined_call_operand.vmem [shape: f32[128,128], index: 16, kind: output, shape index: {1}, may-alias: {1,16}]
  %17 = xla_tuple %s15, %s16
  %s18 = sld [smem:[#allocation0]]
  $region125: #{gnn_forward.1} parent=0
    _
  %s20 = ssub.s32 1, %s18
  %s21 = scalar_select 0, %s20, %s18
  $region1: #{gnn_forward.1} parent=0
    #allocation2 [shape = 'u8[65536]{0}', space=vmem, size = 0x10000, scoped, tag = 'input window, operand 5']
    #allocation3 [shape = 's32[2]{0}', space=sflag, size = 0x8, scoped, tag = 'scoped memory for gnn_forward.1']
    #allocation4 [shape = 'u8[65536]{0}', space=vmem, size = 0x10000, scoped, tag = 'input window, operand 7']
    #allocation5 [shape = 's32[2]{0}', space=sflag, size = 0x8, scoped, tag = 'scoped memory for gnn_forward.1']
    #allocation6 [shape = 'u8[65536]{0}', space=vmem, size = 0x10000, scoped, tag = 'input window, operand 9']
    #allocation7 [shape = 'u8[65536]{0}', space=vmem, size = 0x10000, scoped, tag = 'input window, operand 11']
    #allocation8 [shape = 's32[2]{0}', space=sflag, size = 0x8, scoped, tag = 'scoped memory for gnn_forward.1']
    #allocation9 [shape = 'u8[65536]{0}', space=vmem, size = 0x10000, scoped, tag = 'input window, operand 13']
    %22 = vsyncpa [#allocation3], 0
    %s23 = scalar_lea.sflag [#allocation3], 1
    %24 = vsyncpa %s23, 0
    %25 = vsyncpa [#allocation5], 0
    %s26 = scalar_lea.sflag [#allocation5], 1
    %27 = vsyncpa %s26, 0
    %28 = vsyncpa [#allocation8], 0
    %s29 = scalar_lea.sflag [#allocation8], 1
    %30 = vsyncpa %s29, 0
    loop: start=0, step=1, limit=4
    $region2: #{gnn_forward.1} parent=1 // loop_pre_header
      _
    $region3: #{gnn_forward.1} parent=1 // loop_header
      %s32 = sphi 0, %s36
      %p33 = scmp.ge.s32.totalorder %s32, 4
      %s40 = sphi 0, %s40
      %s42 = sphi 0, %s40
      %s43 = sphi 0, %s42
      %s57 = sphi 0, %s43
      %s61 = sphi 0, %s61
      %s63 = sphi 0, %s61
      %s64 = sphi 0, %s63
      %s78 = sphi 0, %s64
      %s82 = sphi 0, %s82
      %s84 = sphi 0, %s82
      %s85 = sphi 0, %s84
      %s99 = sphi 0, %s85
      %s105 = sphi 0, %s107
      %s108 = sphi 0, %s105
      %s109 = sphi 0, %s108
      %s125 = sphi 0, %s109
      %s131 = sphi 0, %s133
      %s134 = sphi 0, %s131
      %s135 = sphi 0, %s134
      %s151 = sphi 0, %s135
      %s157 = sphi 0, %s159
      %s160 = sphi 0, %s157
      %s161 = sphi 0, %s160
      %s177 = sphi 0, %s161
      %s183 = sphi 0, %s185
      %s186 = sphi 0, %s183
      %s187 = sphi 0, %s186
      %s203 = sphi 0, %s187
      %s209 = sphi 0, %s211
      %s212 = sphi 0, %s209
      %s213 = sphi 0, %s212
      %s229 = sphi 0, %s213
      %s235 = sphi 0, %s237
      %s238 = sphi 0, %s235
      %s239 = sphi 0, %s238
      %s255 = sphi 0, %s239
      %s261 = sphi 0, %s263
      %s264 = sphi 0, %s261
      %s265 = sphi 0, %s264
      %s281 = sphi 0, %s265
      %s287 = sphi 0, %s289
      %s290 = sphi 0, %s287
      %s291 = sphi 0, %s290
      %s307 = sphi 0, %s291
      %s313 = sphi 0, %s315
      %s316 = sphi 0, %s313
      %s317 = sphi 0, %s316
      %s333 = sphi 0, %s317
      %s339 = sphi 0, %s341
      %s342 = sphi 0, %s339
      %s343 = sphi 0, %s342
      %s359 = sphi 0, %s343
      %s365 = sphi 0, %s367
      %s368 = sphi 0, %s365
      %s369 = sphi 0, %s368
      %s385 = sphi 0, %s369
      %s391 = sphi 0, %s393
      %s394 = sphi 0, %s391
      %s395 = sphi 0, %s394
      %s411 = sphi 0, %s395
      %s415 = sphi 0, %s415
      %s417 = sphi 0, %s415
      %s418 = sphi 0, %s417
      %s432 = sphi 0, %s418
      %s436 = sphi 0, %s436
      %s438 = sphi 0, %s436
      %s439 = sphi 0, %s438
      %s453 = sphi 0, %s439
    $region4: #{gnn_forward.1} parent=1 // loop_header_branch
      %35 = sbr.rel (%p33) target = $region8
    $region5: #{gnn_forward.1} parent=1 // loop_body
      %s37 = ssub.s32 %s32, 1
      %s38 = ssub.s32 %s32, 2
      %s39 = sadd.s32 %s32, 1
      %s41 = sadd.s32 %s40, 1
      %p44 = scmp.eq.s32.totalorder %s32, 1
      %p45 = scmp.ne.s32.totalorder %s40, %s42
      %p46 = scmp.eq.s32.totalorder %s32, 0
      %p47 = por %p45, %p46
      %p48 = scmp.ne.s32.totalorder %s40, %s42
      %p49 = scmp.eq.s32.totalorder %s37, 1
      %p50 = por %p48, %p49
      %p51 = scmp.ne.s32.totalorder %s42, %s43
      %p52 = scmp.eq.s32.totalorder %s37, 0
      %p53 = por %p51, %p52
      %p54 = scmp.ne.s32.totalorder %s42, %s43
      %p55 = scmp.eq.s32.totalorder %s38, 1
      %p56 = por %p54, %p55
      %p58 = scmp.ne.s32.totalorder %s43, %s57
      %p59 = scmp.eq.s32.totalorder %s38, 0
      %p60 = por %p58, %p59
      %s62 = sadd.s32 %s61, 1
      %p65 = scmp.eq.s32.totalorder %s32, 1
      %p66 = scmp.ne.s32.totalorder %s61, %s63
      %p67 = scmp.eq.s32.totalorder %s32, 0
      %p68 = por %p66, %p67
      %p69 = scmp.ne.s32.totalorder %s61, %s63
      %p70 = scmp.eq.s32.totalorder %s37, 1
      %p71 = por %p69, %p70
      %p72 = scmp.ne.s32.totalorder %s63, %s64
      %p73 = scmp.eq.s32.totalorder %s37, 0
      %p74 = por %p72, %p73
      %p75 = scmp.ne.s32.totalorder %s63, %s64
      %p76 = scmp.eq.s32.totalorder %s38, 1
      %p77 = por %p75, %p76
      %p79 = scmp.ne.s32.totalorder %s64, %s78
      %p80 = scmp.eq.s32.totalorder %s38, 0
      %p81 = por %p79, %p80
      %s83 = sadd.s32 %s82, 1
      %p86 = scmp.eq.s32.totalorder %s32, 1
      %p87 = scmp.ne.s32.totalorder %s82, %s84
      %p88 = scmp.eq.s32.totalorder %s32, 0
      %p89 = por %p87, %p88
      %p90 = scmp.ne.s32.totalorder %s82, %s84
      %p91 = scmp.eq.s32.totalorder %s37, 1
      %p92 = por %p90, %p91
      %p93 = scmp.ne.s32.totalorder %s84, %s85
      %p94 = scmp.eq.s32.totalorder %s37, 0
      %p95 = por %p93, %p94
      %p96 = scmp.ne.s32.totalorder %s84, %s85
      %p97 = scmp.eq.s32.totalorder %s38, 1
      %p98 = por %p96, %p97
      %p100 = scmp.ne.s32.totalorder %s85, %s99
      %p101 = scmp.eq.s32.totalorder %s38, 0
      %p102 = por %p100, %p101
      %s103 = ssub.s32 %s32, %s39
      %p104 = scmp.eq.s32.totalorder %s103, 0
      %s106 = sadd.s32 %s105, 1
      %s107 = scalar_select %p104, %s105, %s106
      %p110 = pneg %p104
      %p111 = scmp.eq.s32.totalorder %s32, 1
      %p112 = por %p110, %p111
      %p113 = scmp.ne.s32.totalorder %s105, %s108
      %p114 = scmp.eq.s32.totalorder %s32, 0
      %p115 = por %p113, %p114
      %p116 = scmp.ne.s32.totalorder %s105, %s108
      %p117 = scmp.eq.s32.totalorder %s37, 1
      %p118 = por %p116, %p117
      %p119 = scmp.ne.s32.totalorder %s108, %s109
      %p120 = scmp.eq.s32.totalorder %s37, 0
      %p121 = por %p119, %p120
      %p122 = scmp.ne.s32.totalorder %s108, %s109
      %p123 = scmp.eq.s32.totalorder %s38, 1
      %p124 = por %p122, %p123
      %p126 = scmp.ne.s32.totalorder %s109, %s125
      %p127 = scmp.eq.s32.totalorder %s38, 0
      %p128 = por %p126, %p127
      %s129 = ssub.s32 %s32, %s39
      %p130 = scmp.eq.s32.totalorder %s129, 0
      %s132 = sadd.s32 %s131, 1
      %s133 = scalar_select %p130, %s131, %s132
      %p136 = pneg %p130
      %p137 = scmp.eq.s32.totalorder %s32, 1
      %p138 = por %p136, %p137
      %p139 = scmp.ne.s32.totalorder %s131, %s134
      %p140 = scmp.eq.s32.totalorder %s32, 0
      %p141 = por %p139, %p140
      %p142 = scmp.ne.s32.totalorder %s131, %s134
      %p143 = scmp.eq.s32.totalorder %s37, 1
      %p144 = por %p142, %p143
      %p145 = scmp.ne.s32.totalorder %s134, %s135
      %p146 = scmp.eq.s32.totalorder %s37, 0
      %p147 = por %p145, %p146
      %p148 = scmp.ne.s32.totalorder %s134, %s135
      %p149 = scmp.eq.s32.totalorder %s38, 1
      %p150 = por %p148, %p149
      %p152 = scmp.ne.s32.totalorder %s135, %s151
      %p153 = scmp.eq.s32.totalorder %s38, 0
      %p154 = por %p152, %p153
      %s155 = ssub.s32 %s32, %s39
      %p156 = scmp.eq.s32.totalorder %s155, 0
      %s158 = sadd.s32 %s157, 1
      %s159 = scalar_select %p156, %s157, %s158
      %p162 = pneg %p156
      %p163 = scmp.eq.s32.totalorder %s32, 1
      %p164 = por %p162, %p163
      %p165 = scmp.ne.s32.totalorder %s157, %s160
      %p166 = scmp.eq.s32.totalorder %s32, 0
      %p167 = por %p165, %p166
      %p168 = scmp.ne.s32.totalorder %s157, %s160
      %p169 = scmp.eq.s32.totalorder %s37, 1
      %p170 = por %p168, %p169
      %p171 = scmp.ne.s32.totalorder %s160, %s161
      %p172 = scmp.eq.s32.totalorder %s37, 0
      %p173 = por %p171, %p172
      %p174 = scmp.ne.s32.totalorder %s160, %s161
      %p175 = scmp.eq.s32.totalorder %s38, 1
      %p176 = por %p174, %p175
      %p178 = scmp.ne.s32.totalorder %s161, %s177
      %p179 = scmp.eq.s32.totalorder %s38, 0
      %p180 = por %p178, %p179
      %s181 = ssub.s32 %s32, %s39
      %p182 = scmp.eq.s32.totalorder %s181, 0
      %s184 = sadd.s32 %s183, 1
      %s185 = scalar_select %p182, %s183, %s184
      %p188 = pneg %p182
      %p189 = scmp.eq.s32.totalorder %s32, 1
      %p190 = por %p188, %p189
      %p191 = scmp.ne.s32.totalorder %s183, %s186
      %p192 = scmp.eq.s32.totalorder %s32, 0
      %p193 = por %p191, %p192
      %p194 = scmp.ne.s32.totalorder %s183, %s186
      %p195 = scmp.eq.s32.totalorder %s37, 1
      %p196 = por %p194, %p195
      %p197 = scmp.ne.s32.totalorder %s186, %s187
      %p198 = scmp.eq.s32.totalorder %s37, 0
      %p199 = por %p197, %p198
      %p200 = scmp.ne.s32.totalorder %s186, %s187
      %p201 = scmp.eq.s32.totalorder %s38, 1
      %p202 = por %p200, %p201
      %p204 = scmp.ne.s32.totalorder %s187, %s203
      %p205 = scmp.eq.s32.totalorder %s38, 0
      %p206 = por %p204, %p205
      %s207 = ssub.s32 %s32, %s39
      %p208 = scmp.eq.s32.totalorder %s207, 0
      %s210 = sadd.s32 %s209, 1
      %s211 = scalar_select %p208, %s209, %s210
      %p214 = pneg %p208
      %p215 = scmp.eq.s32.totalorder %s32, 1
      %p216 = por %p214, %p215
      %p217 = scmp.ne.s32.totalorder %s209, %s212
      %p218 = scmp.eq.s32.totalorder %s32, 0
      %p219 = por %p217, %p218
      %p220 = scmp.ne.s32.totalorder %s209, %s212
      %p221 = scmp.eq.s32.totalorder %s37, 1
      %p222 = por %p220, %p221
      %p223 = scmp.ne.s32.totalorder %s212, %s213
      %p224 = scmp.eq.s32.totalorder %s37, 0
      %p225 = por %p223, %p224
      %p226 = scmp.ne.s32.totalorder %s212, %s213
      %p227 = scmp.eq.s32.totalorder %s38, 1
      %p228 = por %p226, %p227
      %p230 = scmp.ne.s32.totalorder %s213, %s229
      %p231 = scmp.eq.s32.totalorder %s38, 0
      %p232 = por %p230, %p231
      %s233 = ssub.s32 %s32, %s39
      %p234 = scmp.eq.s32.totalorder %s233, 0
      %s236 = sadd.s32 %s235, 1
      %s237 = scalar_select %p234, %s235, %s236
      %p240 = pneg %p234
      %p241 = scmp.eq.s32.totalorder %s32, 1
      %p242 = por %p240, %p241
      %p243 = scmp.ne.s32.totalorder %s235, %s238
      %p244 = scmp.eq.s32.totalorder %s32, 0
      %p245 = por %p243, %p244
      %p246 = scmp.ne.s32.totalorder %s235, %s238
      %p247 = scmp.eq.s32.totalorder %s37, 1
      %p248 = por %p246, %p247
      %p249 = scmp.ne.s32.totalorder %s238, %s239
      %p250 = scmp.eq.s32.totalorder %s37, 0
      %p251 = por %p249, %p250
      %p252 = scmp.ne.s32.totalorder %s238, %s239
      %p253 = scmp.eq.s32.totalorder %s38, 1
      %p254 = por %p252, %p253
      %p256 = scmp.ne.s32.totalorder %s239, %s255
      %p257 = scmp.eq.s32.totalorder %s38, 0
      %p258 = por %p256, %p257
      %s259 = ssub.s32 %s32, %s39
      %p260 = scmp.eq.s32.totalorder %s259, 0
      %s262 = sadd.s32 %s261, 1
      %s263 = scalar_select %p260, %s261, %s262
      %p266 = pneg %p260
      %p267 = scmp.eq.s32.totalorder %s32, 1
      %p268 = por %p266, %p267
      %p269 = scmp.ne.s32.totalorder %s261, %s264
      %p270 = scmp.eq.s32.totalorder %s32, 0
      %p271 = por %p269, %p270
      %p272 = scmp.ne.s32.totalorder %s261, %s264
      %p273 = scmp.eq.s32.totalorder %s37, 1
      %p274 = por %p272, %p273
      %p275 = scmp.ne.s32.totalorder %s264, %s265
      %p276 = scmp.eq.s32.totalorder %s37, 0
      %p277 = por %p275, %p276
      %p278 = scmp.ne.s32.totalorder %s264, %s265
      %p279 = scmp.eq.s32.totalorder %s38, 1
      %p280 = por %p278, %p279
      %p282 = scmp.ne.s32.totalorder %s265, %s281
      %p283 = scmp.eq.s32.totalorder %s38, 0
      %p284 = por %p282, %p283
      %s285 = ssub.s32 %s32, %s39
      %p286 = scmp.eq.s32.totalorder %s285, 0
      %s288 = sadd.s32 %s287, 1
      %s289 = scalar_select %p286, %s287, %s288
      %p292 = pneg %p286
      %p293 = scmp.eq.s32.totalorder %s32, 1
      %p294 = por %p292, %p293
      %p295 = scmp.ne.s32.totalorder %s287, %s290
      %p296 = scmp.eq.s32.totalorder %s32, 0
      %p297 = por %p295, %p296
      %p298 = scmp.ne.s32.totalorder %s287, %s290
      %p299 = scmp.eq.s32.totalorder %s37, 1
      %p300 = por %p298, %p299
      %p301 = scmp.ne.s32.totalorder %s290, %s291
      %p302 = scmp.eq.s32.totalorder %s37, 0
      %p303 = por %p301, %p302
      %p304 = scmp.ne.s32.totalorder %s290, %s291
      %p305 = scmp.eq.s32.totalorder %s38, 1
      %p306 = por %p304, %p305
      %p308 = scmp.ne.s32.totalorder %s291, %s307
      %p309 = scmp.eq.s32.totalorder %s38, 0
      %p310 = por %p308, %p309
      %s311 = ssub.s32 %s32, %s39
      %p312 = scmp.eq.s32.totalorder %s311, 0
      %s314 = sadd.s32 %s313, 1
      %s315 = scalar_select %p312, %s313, %s314
      %p318 = pneg %p312
      %p319 = scmp.eq.s32.totalorder %s32, 1
      %p320 = por %p318, %p319
      %p321 = scmp.ne.s32.totalorder %s313, %s316
      %p322 = scmp.eq.s32.totalorder %s32, 0
      %p323 = por %p321, %p322
      %p324 = scmp.ne.s32.totalorder %s313, %s316
      %p325 = scmp.eq.s32.totalorder %s37, 1
      %p326 = por %p324, %p325
      %p327 = scmp.ne.s32.totalorder %s316, %s317
      %p328 = scmp.eq.s32.totalorder %s37, 0
      %p329 = por %p327, %p328
      %p330 = scmp.ne.s32.totalorder %s316, %s317
      %p331 = scmp.eq.s32.totalorder %s38, 1
      %p332 = por %p330, %p331
      %p334 = scmp.ne.s32.totalorder %s317, %s333
      %p335 = scmp.eq.s32.totalorder %s38, 0
      %p336 = por %p334, %p335
      %s337 = ssub.s32 %s32, %s39
      %p338 = scmp.eq.s32.totalorder %s337, 0
      %s340 = sadd.s32 %s339, 1
      %s341 = scalar_select %p338, %s339, %s340
      %p344 = pneg %p338
      %p345 = scmp.eq.s32.totalorder %s32, 1
      %p346 = por %p344, %p345
      %p347 = scmp.ne.s32.totalorder %s339, %s342
      %p348 = scmp.eq.s32.totalorder %s32, 0
      %p349 = por %p347, %p348
      %p350 = scmp.ne.s32.totalorder %s339, %s342
      %p351 = scmp.eq.s32.totalorder %s37, 1
      %p352 = por %p350, %p351
      %p353 = scmp.ne.s32.totalorder %s342, %s343
      %p354 = scmp.eq.s32.totalorder %s37, 0
      %p355 = por %p353, %p354
      %p356 = scmp.ne.s32.totalorder %s342, %s343
      %p357 = scmp.eq.s32.totalorder %s38, 1
      %p358 = por %p356, %p357
      %p360 = scmp.ne.s32.totalorder %s343, %s359
      %p361 = scmp.eq.s32.totalorder %s38, 0
      %p362 = por %p360, %p361
      %s363 = ssub.s32 %s32, %s39
      %p364 = scmp.eq.s32.totalorder %s363, 0
      %s366 = sadd.s32 %s365, 1
      %s367 = scalar_select %p364, %s365, %s366
      %p370 = pneg %p364
      %p371 = scmp.eq.s32.totalorder %s32, 1
      %p372 = por %p370, %p371
      %p373 = scmp.ne.s32.totalorder %s365, %s368
      %p374 = scmp.eq.s32.totalorder %s32, 0
      %p375 = por %p373, %p374
      %p376 = scmp.ne.s32.totalorder %s365, %s368
      %p377 = scmp.eq.s32.totalorder %s37, 1
      %p378 = por %p376, %p377
      %p379 = scmp.ne.s32.totalorder %s368, %s369
      %p380 = scmp.eq.s32.totalorder %s37, 0
      %p381 = por %p379, %p380
      %p382 = scmp.ne.s32.totalorder %s368, %s369
      %p383 = scmp.eq.s32.totalorder %s38, 1
      %p384 = por %p382, %p383
      %p386 = scmp.ne.s32.totalorder %s369, %s385
      %p387 = scmp.eq.s32.totalorder %s38, 0
      %p388 = por %p386, %p387
      %s389 = ssub.s32 %s32, %s39
      %p390 = scmp.eq.s32.totalorder %s389, 0
      %s392 = sadd.s32 %s391, 1
      %s393 = scalar_select %p390, %s391, %s392
      %p396 = pneg %p390
      %p397 = scmp.eq.s32.totalorder %s32, 1
      %p398 = por %p396, %p397
      %p399 = scmp.ne.s32.totalorder %s391, %s394
      %p400 = scmp.eq.s32.totalorder %s32, 0
      %p401 = por %p399, %p400
      %p402 = scmp.ne.s32.totalorder %s391, %s394
      %p403 = scmp.eq.s32.totalorder %s37, 1
      %p404 = por %p402, %p403
      %p405 = scmp.ne.s32.totalorder %s394, %s395
      %p406 = scmp.eq.s32.totalorder %s37, 0
      %p407 = por %p405, %p406
      %p408 = scmp.ne.s32.totalorder %s394, %s395
      %p409 = scmp.eq.s32.totalorder %s38, 1
      %p410 = por %p408, %p409
      %p412 = scmp.ne.s32.totalorder %s395, %s411
      %p413 = scmp.eq.s32.totalorder %s38, 0
      %p414 = por %p412, %p413
      %s416 = sadd.s32 %s415, 1
      %p419 = scmp.eq.s32.totalorder %s32, 1
      %p420 = scmp.ne.s32.totalorder %s415, %s417
      %p421 = scmp.eq.s32.totalorder %s32, 0
      %p422 = por %p420, %p421
      %p423 = scmp.ne.s32.totalorder %s415, %s417
      %p424 = scmp.eq.s32.totalorder %s37, 1
      %p425 = por %p423, %p424
      %p426 = scmp.ne.s32.totalorder %s417, %s418
      %p427 = scmp.eq.s32.totalorder %s37, 0
      %p428 = por %p426, %p427
      %p429 = scmp.ne.s32.totalorder %s417, %s418
      %p430 = scmp.eq.s32.totalorder %s38, 1
      %p431 = por %p429, %p430
      %p433 = scmp.ne.s32.totalorder %s418, %s432
      %p434 = scmp.eq.s32.totalorder %s38, 0
      %p435 = por %p433, %p434
      %s437 = sadd.s32 %s436, 1
      %p440 = scmp.eq.s32.totalorder %s32, 1
      %p441 = scmp.ne.s32.totalorder %s436, %s438
      %p442 = scmp.eq.s32.totalorder %s32, 0
      %p443 = por %p441, %p442
      %p444 = scmp.ne.s32.totalorder %s436, %s438
      %p445 = scmp.eq.s32.totalorder %s37, 1
      %p446 = por %p444, %p445
      %p447 = scmp.ne.s32.totalorder %s438, %s439
      %p448 = scmp.eq.s32.totalorder %s37, 0
      %p449 = por %p447, %p448
      %p450 = scmp.ne.s32.totalorder %s438, %s439
      %p451 = scmp.eq.s32.totalorder %s38, 1
      %p452 = por %p450, %p451
      %p454 = scmp.ne.s32.totalorder %s439, %s453
      %p455 = scmp.eq.s32.totalorder %s38, 0
      %p456 = por %p454, %p455
      %p457 = scmp.le.s32.totalorder 1, %s32
      %p458 = scmp.lt.s32.totalorder %s32, 3
      %p459 = pnand %p457, %p458
      %p460 = pneg %p459
      // Predicated region
      $region9: #{gnn_forward.1} parent=5 // pred_check
        _
      $region10: #{gnn_forward.1} parent=5 // pred_check_branch
        %462 = sbr.rel (%p459) target = $region12
      $region11: #{gnn_forward.1} parent=5 // pred_region
        %s463 = ssub.s32 %s32, 1
        // Predicated region
        $region13: #{gnn_forward.1} parent=11 // pred_check
          %p464 = pneg %p53
        $region14: #{gnn_forward.1} parent=11 // pred_check_branch
          %466 = sbr.rel (%p464) target = $region16
        $region15: #{gnn_forward.1} parent=11 // pred_region
          _
        $region16: #{gnn_forward.1} parent=11 // pred_fallthru
          _
        // Predicated region
        $region17: #{gnn_forward.1} parent=11 // pred_check
          %p467 = pneg %p74
        $region18: #{gnn_forward.1} parent=11 // pred_check_branch
          %469 = sbr.rel (%p467) target = $region20
        $region19: #{gnn_forward.1} parent=11 // pred_region
          _
        $region20: #{gnn_forward.1} parent=11 // pred_fallthru
          _
        // Predicated region
        $region21: #{gnn_forward.1} parent=11 // pred_check
          %p470 = pneg %p95
        $region22: #{gnn_forward.1} parent=11 // pred_check_branch
          %472 = sbr.rel (%p470) target = $region24
        $region23: #{gnn_forward.1} parent=11 // pred_region
          _
        $region24: #{gnn_forward.1} parent=11 // pred_fallthru
          _
      $region12: #{gnn_forward.1} parent=5 // pred_fallthru
        _
      %p473 = scmp.lt.s32.totalorder %s32, 2
      // Predicated region
      $region25: #{gnn_forward.1} parent=5 // pred_check
        %p474 = pneg %p473
      $region26: #{gnn_forward.1} parent=5 // pred_check_branch
        %476 = sbr.rel (%p474) target = $region28
      $region27: #{gnn_forward.1} parent=5 // pred_region
        // Predicated region
        $region29: #{gnn_forward.1} parent=27 // pred_check
          %p477 = pneg %p115
        $region30: #{gnn_forward.1} parent=27 // pred_check_branch
          %479 = sbr.rel (%p477) target = $region32
        $region31: #{gnn_forward.1} parent=27 // pred_region
          %p480 = scmp.lt.s32.totalorder %s32, 1
          %s481 = scalar_select %p480, %s32, 1
          %s482 = smul.addr %s481, 16
          %s483 = smul.addr %s482, 4
          %s484 = scalar_lea.vmem %s3, %s483
        $region32: #{gnn_forward.1} parent=27 // pred_fallthru
          _
        // Predicated region
        $region33: #{gnn_forward.1} parent=27 // pred_check
          %p485 = pneg %p141
        $region34: #{gnn_forward.1} parent=27 // pred_check_branch
          %487 = sbr.rel (%p485) target = $region36
        $region35: #{gnn_forward.1} parent=27 // pred_region
          %p488 = scmp.lt.s32.totalorder %s32, 1
          %s489 = scalar_select %p488, %s32, 1
          %s490 = scalar_lea.vmem %s4, %s489
        $region36: #{gnn_forward.1} parent=27 // pred_fallthru
          _
        // Predicated region
        $region37: #{gnn_forward.1} parent=27 // pred_check
          %p491 = pneg %p167
        $region38: #{gnn_forward.1} parent=27 // pred_check_branch
          %493 = sbr.rel (%p491) target = $region40
        $region39: #{gnn_forward.1} parent=27 // pred_region
          %s494 = sand.u32 %s157, 1
          %s495 = scalar_lea.sflag [#allocation3], %s494
          %s496 = sand.u32 %s157, 1
          %s497 = smul.addr %s496, 64
          %s498 = scalar_lea.vmem [#allocation2], %s497
          %s500 = ssub.s32 1024, 1024
          %501 = vsyncadd %s495, %s500
          %s502 = smul.addr %s32, 16
          %s503 = smul.addr %s502, 64
          %s504 = scalar_lea.hbm %s5, %s503
          %s505 = sshll.u32 %s498, 4
          %s506 = int_to_ptr.vmem [resolvable:$true] %s505
          %511 = dma.hbm_to_vmem [thread:$0]  %s504, 1024, %s506, %s495, 64, 64, 4
        $region40: #{gnn_forward.1} parent=27 // pred_fallthru
          _
        // Predicated region
        $region41: #{gnn_forward.1} parent=27 // pred_check
          %p512 = pneg %p193
        $region42: #{gnn_forward.1} parent=27 // pred_check_branch
          %514 = sbr.rel (%p512) target = $region44
        $region43: #{gnn_forward.1} parent=27 // pred_region
          %p515 = scmp.lt.s32.totalorder %s32, 1
          %s516 = scalar_select %p515, %s32, 1
          %s517 = scalar_lea.vmem %s6, %s516
        $region44: #{gnn_forward.1} parent=27 // pred_fallthru
          _
        // Predicated region
        $region45: #{gnn_forward.1} parent=27 // pred_check
          %p518 = pneg %p219
        $region46: #{gnn_forward.1} parent=27 // pred_check_branch
          %520 = sbr.rel (%p518) target = $region48
        $region47: #{gnn_forward.1} parent=27 // pred_region
          %s521 = sand.u32 %s32, 1
          %s522 = scalar_lea.sflag [#allocation5], %s521
          %s523 = sand.u32 %s209, 1
          %s524 = smul.addr %s523, 64
          %s525 = scalar_lea.vmem [#allocation4], %s524
          %s527 = ssub.s32 1024, 1024
          %528 = vsyncadd %s522, %s527
          %s529 = smul.addr %s32, 16
          %s530 = smul.addr %s529, 64
          %s531 = scalar_lea.hbm %s7, %s530
          %s532 = sshll.u32 %s525, 4
          %s533 = int_to_ptr.vmem [resolvable:$true] %s532
          %538 = dma.hbm_to_vmem [thread:$0]  %s531, 1024, %s533, %s522, 64, 64, 4
        $region48: #{gnn_forward.1} parent=27 // pred_fallthru
          _
        // Predicated region
        $region49: #{gnn_forward.1} parent=27 // pred_check
          %p539 = pneg %p245
        $region50: #{gnn_forward.1} parent=27 // pred_check_branch
          %541 = sbr.rel (%p539) target = $region52
        $region51: #{gnn_forward.1} parent=27 // pred_region
          %p542 = scmp.lt.s32.totalorder %s32, 1
          %s543 = scalar_select %p542, %s32, 1
          %s544 = scalar_lea.vmem %s8, %s543
        $region52: #{gnn_forward.1} parent=27 // pred_fallthru
          _
        // Predicated region
        $region53: #{gnn_forward.1} parent=27 // pred_check
          %p545 = pneg %p271
        $region54: #{gnn_forward.1} parent=27 // pred_check_branch
          %547 = sbr.rel (%p545) target = $region56
        $region55: #{gnn_forward.1} parent=27 // pred_region
          %s548 = sand.u32 %s32, 1
          %s549 = scalar_lea.sflag [#allocation5], %s548
          %s550 = sand.u32 %s261, 1
          %s551 = smul.addr %s550, 64
          %s552 = scalar_lea.vmem [#allocation6], %s551
          %s554 = ssub.s32 1024, 1024
          %555 = vsyncadd %s549, %s554
          %s556 = smul.addr %s32, 16
          %s557 = smul.addr %s556, 64
          %s558 = scalar_lea.hbm %s9, %s557
          %s559 = sshll.u32 %s552, 4
          %s560 = int_to_ptr.vmem [resolvable:$true] %s559
          %565 = dma.hbm_to_vmem [thread:$0]  %s558, 1024, %s560, %s549, 64, 64, 4
        $region56: #{gnn_forward.1} parent=27 // pred_fallthru
          _
        // Predicated region
        $region57: #{gnn_forward.1} parent=27 // pred_check
          %p566 = pneg %p297
        $region58: #{gnn_forward.1} parent=27 // pred_check_branch
          %568 = sbr.rel (%p566) target = $region60
        $region59: #{gnn_forward.1} parent=27 // pred_region
          %p569 = scmp.lt.s32.totalorder %s32, 1
          %s570 = scalar_select %p569, %s32, 1
          %s571 = scalar_lea.vmem %s10, %s570
        $region60: #{gnn_forward.1} parent=27 // pred_fallthru
          _
        // Predicated region
        $region61: #{gnn_forward.1} parent=27 // pred_check
          %p572 = pneg %p323
        $region62: #{gnn_forward.1} parent=27 // pred_check_branch
          %574 = sbr.rel (%p572) target = $region64
        $region63: #{gnn_forward.1} parent=27 // pred_region
          %s575 = sand.u32 %s32, 1
          %s576 = scalar_lea.sflag [#allocation8], %s575
          %s577 = sand.u32 %s313, 1
          %s578 = smul.addr %s577, 64
          %s579 = scalar_lea.vmem [#allocation7], %s578
          %s581 = ssub.s32 1024, 1024
          %582 = vsyncadd %s576, %s581
          %s583 = smul.addr %s32, 16
          %s584 = smul.addr %s583, 64
          %s585 = scalar_lea.hbm %s11, %s584
          %s586 = sshll.u32 %s579, 4
          %s587 = int_to_ptr.vmem [resolvable:$true] %s586
          %592 = dma.hbm_to_vmem [thread:$0]  %s585, 1024, %s587, %s576, 64, 64, 4
        $region64: #{gnn_forward.1} parent=27 // pred_fallthru
          _
        // Predicated region
        $region65: #{gnn_forward.1} parent=27 // pred_check
          %p593 = pneg %p349
        $region66: #{gnn_forward.1} parent=27 // pred_check_branch
          %595 = sbr.rel (%p593) target = $region68
        $region67: #{gnn_forward.1} parent=27 // pred_region
          %p596 = scmp.lt.s32.totalorder %s32, 1
          %s597 = scalar_select %p596, %s32, 1
          %s598 = scalar_lea.vmem %s12, %s597
        $region68: #{gnn_forward.1} parent=27 // pred_fallthru
          _
        // Predicated region
        $region69: #{gnn_forward.1} parent=27 // pred_check
          %p599 = pneg %p375
        $region70: #{gnn_forward.1} parent=27 // pred_check_branch
          %601 = sbr.rel (%p599) target = $region72
        $region71: #{gnn_forward.1} parent=27 // pred_region
          %s602 = sand.u32 %s32, 1
          %s603 = scalar_lea.sflag [#allocation8], %s602
          %s604 = sand.u32 %s365, 1
          %s605 = smul.addr %s604, 64
          %s606 = scalar_lea.vmem [#allocation9], %s605
          %s608 = ssub.s32 1024, 1024
          %609 = vsyncadd %s603, %s608
          %s610 = smul.addr %s32, 16
          %s611 = smul.addr %s610, 64
          %s612 = scalar_lea.hbm %s13, %s611
          %s613 = sshll.u32 %s606, 4
          %s614 = int_to_ptr.vmem [resolvable:$true] %s613
          %619 = dma.hbm_to_vmem [thread:$0]  %s612, 1024, %s614, %s603, 64, 64, 4
        $region72: #{gnn_forward.1} parent=27 // pred_fallthru
          _
        // Predicated region
        $region73: #{gnn_forward.1} parent=27 // pred_check
          %p620 = pneg %p401
        $region74: #{gnn_forward.1} parent=27 // pred_check_branch
          %622 = sbr.rel (%p620) target = $region76
        $region75: #{gnn_forward.1} parent=27 // pred_region
          %p623 = scmp.lt.s32.totalorder %s32, 1
          %s624 = scalar_select %p623, %s32, 1
          %s625 = scalar_lea.vmem %s14, %s624
        $region76: #{gnn_forward.1} parent=27 // pred_fallthru
          _
      $region28: #{gnn_forward.1} parent=5 // pred_fallthru
        _
      %p626 = scmp.le.s32.totalorder 1, %s32
      %p627 = scmp.lt.s32.totalorder %s32, 3
      %p628 = pnand %p626, %p627
      %p629 = pneg %p628
      // Predicated region
      $region77: #{gnn_forward.1} parent=5 // pred_check
        _
      $region78: #{gnn_forward.1} parent=5 // pred_check_branch
        %631 = sbr.rel (%p628) target = $region80
      $region79: #{gnn_forward.1} parent=5 // pred_region
        %s632 = ssub.s32 %s32, 1
        %s633 = sand.u32 %s160, 1
        %s634 = scalar_lea.sflag [#allocation3], %s633
        %s635 = sand.u32 %s160, 1
        %s636 = smul.addr %s635, 64
        %s637 = scalar_lea.vmem [#allocation2], %s636
        // Predicated region
        $region81: #{gnn_forward.1} parent=79 // pred_check
          %p638 = pneg %p173
        $region82: #{gnn_forward.1} parent=79 // pred_check_branch
          %640 = sbr.rel (%p638) target = $region84
        $region83: #{gnn_forward.1} parent=79 // pred_region
          %641 = dma.done %s634, 1024
        $region84: #{gnn_forward.1} parent=79 // pred_fallthru
          _
        %s642 = sand.u32 %s37, 1
        %s643 = scalar_lea.sflag [#allocation5], %s642
        %s644 = sand.u32 %s212, 1
        %s645 = smul.addr %s644, 64
        %s646 = scalar_lea.vmem [#allocation4], %s645
        // Predicated region
        $region85: #{gnn_forward.1} parent=79 // pred_check
          %p647 = pneg %p225
        $region86: #{gnn_forward.1} parent=79 // pred_check_branch
          %649 = sbr.rel (%p647) target = $region88
        $region87: #{gnn_forward.1} parent=79 // pred_region
          %650 = dma.done %s643, 1024
        $region88: #{gnn_forward.1} parent=79 // pred_fallthru
          _
        %s651 = sand.u32 %s37, 1
        %s652 = scalar_lea.sflag [#allocation5], %s651
        %s653 = sand.u32 %s264, 1
        %s654 = smul.addr %s653, 64
        %s655 = scalar_lea.vmem [#allocation6], %s654
        // Predicated region
        $region89: #{gnn_forward.1} parent=79 // pred_check
          %p656 = pneg %p277
        $region90: #{gnn_forward.1} parent=79 // pred_check_branch
          %658 = sbr.rel (%p656) target = $region92
        $region91: #{gnn_forward.1} parent=79 // pred_region
          %659 = dma.done %s652, 1024
        $region92: #{gnn_forward.1} parent=79 // pred_fallthru
          _
        %s660 = sand.u32 %s37, 1
        %s661 = scalar_lea.sflag [#allocation8], %s660
        %s662 = sand.u32 %s316, 1
        %s663 = smul.addr %s662, 64
        %s664 = scalar_lea.vmem [#allocation7], %s663
        // Predicated region
        $region93: #{gnn_forward.1} parent=79 // pred_check
          %p665 = pneg %p329
        $region94: #{gnn_forward.1} parent=79 // pred_check_branch
          %667 = sbr.rel (%p665) target = $region96
        $region95: #{gnn_forward.1} parent=79 // pred_region
          %668 = dma.done %s661, 1024
        $region96: #{gnn_forward.1} parent=79 // pred_fallthru
          _
        %s669 = sand.u32 %s37, 1
        %s670 = scalar_lea.sflag [#allocation8], %s669
        %s671 = sand.u32 %s368, 1
        %s672 = smul.addr %s671, 64
        %s673 = scalar_lea.vmem [#allocation9], %s672
        // Predicated region
        $region97: #{gnn_forward.1} parent=79 // pred_check
          %p674 = pneg %p381
        $region98: #{gnn_forward.1} parent=79 // pred_check_branch
          %676 = sbr.rel (%p674) target = $region100
        $region99: #{gnn_forward.1} parent=79 // pred_region
          %677 = dma.done %s670, 1024
        $region100: #{gnn_forward.1} parent=79 // pred_fallthru
          _
        %p678 = pneg %p53
        %p679 = pneg %p50
        %p680 = pneg %p74
        %p681 = pneg %p71
        %p682 = pneg %p95
        %p683 = pneg %p92
        %p684 = scmp.lt.s32.totalorder %s37, 1
        %s685 = scalar_select %p684, %s37, 1
        %s686 = smul.addr %s685, 16
        %s687 = smul.addr %s686, 4
        %s688 = scalar_lea.vmem %s3, %s687
        %p689 = pneg %p121
        %p690 = pneg %p118
        %p691 = scmp.lt.s32.totalorder %s37, 1
        %s692 = scalar_select %p691, %s37, 1
        %s693 = scalar_lea.vmem %s4, %s692
        %p694 = pneg %p147
        %p695 = pneg %p144
        %s696 = sand.u32 %s160, 1
        %s697 = scalar_lea.sflag [#allocation3], %s696
        %s698 = sand.u32 %s160, 1
        %s699 = smul.addr %s698, 64
        %s700 = scalar_lea.vmem [#allocation2], %s699
        %p701 = pneg %p173
        %p702 = pneg %p170
        %p703 = scmp.lt.s32.totalorder %s37, 1
        %s704 = scalar_select %p703, %s37, 1
        %s705 = scalar_lea.vmem %s6, %s704
        %p706 = pneg %p199
        %p707 = pneg %p196
        %s708 = sand.u32 %s37, 1
        %s709 = scalar_lea.sflag [#allocation5], %s708
        %s710 = sand.u32 %s212, 1
        %s711 = smul.addr %s710, 64
        %s712 = scalar_lea.vmem [#allocation4], %s711
        %p713 = pneg %p225
        %p714 = pneg %p222
        %p715 = scmp.lt.s32.totalorder %s37, 1
        %s716 = scalar_select %p715, %s37, 1
        %s717 = scalar_lea.vmem %s8, %s716
        %p718 = pneg %p251
        %p719 = pneg %p248
        %s720 = sand.u32 %s37, 1
        %s721 = scalar_lea.sflag [#allocation5], %s720
        %s722 = sand.u32 %s264, 1
        %s723 = smul.addr %s722, 64
        %s724 = scalar_lea.vmem [#allocation6], %s723
        %p725 = pneg %p277
        %p726 = pneg %p274
        %p727 = scmp.lt.s32.totalorder %s37, 1
        %s728 = scalar_select %p727, %s37, 1
        %s729 = scalar_lea.vmem %s10, %s728
        %p730 = pneg %p303
        %p731 = pneg %p300
        %s732 = sand.u32 %s37, 1
        %s733 = scalar_lea.sflag [#allocation8], %s732
        %s734 = sand.u32 %s316, 1
        %s735 = smul.addr %s734, 64
        %s736 = scalar_lea.vmem [#allocation7], %s735
        %p737 = pneg %p329
        %p738 = pneg %p326
        %p739 = scmp.lt.s32.totalorder %s37, 1
        %s740 = scalar_select %p739, %s37, 1
        %s741 = scalar_lea.vmem %s12, %s740
        %p742 = pneg %p355
        %p743 = pneg %p352
        %s744 = sand.u32 %s37, 1
        %s745 = scalar_lea.sflag [#allocation8], %s744
        %s746 = sand.u32 %s368, 1
        %s747 = smul.addr %s746, 64
        %s748 = scalar_lea.vmem [#allocation9], %s747
        %p749 = pneg %p381
        %p750 = pneg %p378
        %p751 = scmp.lt.s32.totalorder %s37, 1
        %s752 = scalar_select %p751, %s37, 1
        %s753 = scalar_lea.vmem %s14, %s752
        %p754 = pneg %p407
        %p755 = pneg %p404
        %p756 = pneg %p428
        %p757 = pneg %p425
        %p758 = pneg %p449
        %p759 = pneg %p446
        %p760 = scmp.lt.s32.totalorder %s37, 1
        %s761 = scalar_select %p760, %s37, 1
        %s762 = smul.addr %s761, 16
        %s763 = smul.addr %s762, 4
        %s764 = scalar_lea.vmem %s3, %s763
        %p765 = scmp.lt.s32.totalorder %s37, 1
        %s766 = scalar_select %p765, %s37, 1
        %s767 = scalar_lea.vmem %s4, %s766
        %p768 = scmp.lt.s32.totalorder %s37, 1
        %s769 = scalar_select %p768, %s37, 1
        %s770 = scalar_lea.vmem %s6, %s769
        %p771 = scmp.lt.s32.totalorder %s37, 1
        %s772 = scalar_select %p771, %s37, 1
        %s773 = scalar_lea.vmem %s8, %s772
        %p774 = scmp.lt.s32.totalorder %s37, 1
        %s775 = scalar_select %p774, %s37, 1
        %s776 = scalar_lea.vmem %s10, %s775
        %p777 = scmp.lt.s32.totalorder %s37, 1
        %s778 = scalar_select %p777, %s37, 1
        %s779 = scalar_lea.vmem %s12, %s778
        %p780 = scmp.lt.s32.totalorder %s37, 1
        %s781 = scalar_select %p780, %s37, 1
        %s782 = scalar_lea.vmem %s14, %s781
        %p784 = scmp.eq.s32.totalorder %s37, 0
        // Predicated region
        $region101: #{gnn_forward.1} parent=79 // pred_check
          %p785 = pneg %p784
        $region102: #{gnn_forward.1} parent=79 // pred_check_branch
          %787 = sbr.rel (%p785) target = $region104
        $region103: #{gnn_forward.1} parent=79 // pred_region
          %v788 = vld [vmem:[%s0] sm:$0xff]
          %789 = vst [vmem:[%s15] sm:$0xff] %v788
          %v790 = vld [vmem:[%s1] sm:$0xff]
          %v791 = vld [vmem:[%s1 + $0x8] sm:$0xff]
          %v792 = vld [vmem:[%s1 + $0x10] sm:$0xff]
          %v793 = vld [vmem:[%s1 + $0x18] sm:$0xff]
          %v794 = vld [vmem:[%s1 + $0x20] sm:$0xff]
          %v795 = vld [vmem:[%s1 + $0x28] sm:$0xff]
          %v796 = vld [vmem:[%s1 + $0x30] sm:$0xff]
          %v797 = vld [vmem:[%s1 + $0x38] sm:$0xff]
          %v798 = vld [vmem:[%s1 + $0x40] sm:$0xff]
          %v799 = vld [vmem:[%s1 + $0x48] sm:$0xff]
          %v800 = vld [vmem:[%s1 + $0x50] sm:$0xff]
          %v801 = vld [vmem:[%s1 + $0x58] sm:$0xff]
          %v802 = vld [vmem:[%s1 + $0x60] sm:$0xff]
          %v803 = vld [vmem:[%s1 + $0x68] sm:$0xff]
          %v804 = vld [vmem:[%s1 + $0x70] sm:$0xff]
          %v805 = vld [vmem:[%s1 + $0x78] sm:$0xff]
          %806 = vst [vmem:[%s16] sm:$0xff] %v790
          %807 = vst [vmem:[%s16 + $0x8] sm:$0xff] %v791
          %808 = vst [vmem:[%s16 + $0x10] sm:$0xff] %v792
          %809 = vst [vmem:[%s16 + $0x18] sm:$0xff] %v793
          %810 = vst [vmem:[%s16 + $0x20] sm:$0xff] %v794
          %811 = vst [vmem:[%s16 + $0x28] sm:$0xff] %v795
          %812 = vst [vmem:[%s16 + $0x30] sm:$0xff] %v796
          %813 = vst [vmem:[%s16 + $0x38] sm:$0xff] %v797
          %814 = vst [vmem:[%s16 + $0x40] sm:$0xff] %v798
          %815 = vst [vmem:[%s16 + $0x48] sm:$0xff] %v799
          %816 = vst [vmem:[%s16 + $0x50] sm:$0xff] %v800
          %817 = vst [vmem:[%s16 + $0x58] sm:$0xff] %v801
          %818 = vst [vmem:[%s16 + $0x60] sm:$0xff] %v802
          %819 = vst [vmem:[%s16 + $0x68] sm:$0xff] %v803
          %820 = vst [vmem:[%s16 + $0x70] sm:$0xff] %v804
          %821 = vst [vmem:[%s16 + $0x78] sm:$0xff] %v805
        $region104: #{gnn_forward.1} parent=79 // pred_fallthru
          _
        %v822 = vld [vmem:[%s15] sm:$0xff]
        %v823 = vld [vmem:[%s16] sm:$0xff]
        %v824 = vld [vmem:[%s16 + $0x8] sm:$0xff]
        %v825 = vld [vmem:[%s16 + $0x10] sm:$0xff]
        %v826 = vld [vmem:[%s16 + $0x18] sm:$0xff]
        %v827 = vld [vmem:[%s16 + $0x20] sm:$0xff]
        %v828 = vld [vmem:[%s16 + $0x28] sm:$0xff]
        %v829 = vld [vmem:[%s16 + $0x30] sm:$0xff]
        %v830 = vld [vmem:[%s16 + $0x38] sm:$0xff]
        %v831 = vld [vmem:[%s16 + $0x40] sm:$0xff]
        %v832 = vld [vmem:[%s16 + $0x48] sm:$0xff]
        %v833 = vld [vmem:[%s16 + $0x50] sm:$0xff]
        %v834 = vld [vmem:[%s16 + $0x58] sm:$0xff]
        %v835 = vld [vmem:[%s16 + $0x60] sm:$0xff]
        %v836 = vld [vmem:[%s16 + $0x68] sm:$0xff]
        %v837 = vld [vmem:[%s16 + $0x70] sm:$0xff]
        %v838 = vld [vmem:[%s16 + $0x78] sm:$0xff]
        %v839 = vld [vmem:[%s2] sm:$0xf]
        %v840 = vld [vmem:[%s764] sm:$0xf]
        %v841 = vld [vmem:[%s764 + $0x4] sm:$0xf]
        %v842 = vld [vmem:[%s764 + $0x8] sm:$0xf]
        %v843 = vld [vmem:[%s764 + $0xc] sm:$0xf]
        %v844 = vld [vmem:[%s764 + $0x10] sm:$0xf]
        %v845 = vld [vmem:[%s764 + $0x14] sm:$0xf]
        %v846 = vld [vmem:[%s764 + $0x18] sm:$0xf]
        %v847 = vld [vmem:[%s764 + $0x1c] sm:$0xf]
        %v848 = vld [vmem:[%s764 + $0x20] sm:$0xf]
        %v849 = vld [vmem:[%s764 + $0x24] sm:$0xf]
        %v850 = vld [vmem:[%s764 + $0x28] sm:$0xf]
        %v851 = vld [vmem:[%s764 + $0x2c] sm:$0xf]
        %v852 = vld [vmem:[%s764 + $0x30] sm:$0xf]
        %v853 = vld [vmem:[%s764 + $0x34] sm:$0xf]
        %v854 = vld [vmem:[%s764 + $0x38] sm:$0xf]
        %v855 = vld [vmem:[%s764 + $0x3c] sm:$0xf]
        %v856 = vpack.c.bf16 %v822, %v822
        %v873 = vunpack.c.l.b16 %v840
        %v874 = vunpack.c.l.b16 %v841
        %v875 = vunpack.c.l.b16 %v842
        %v876 = vunpack.c.l.b16 %v843
        %v877 = vunpack.c.l.b16 %v844
        %v878 = vunpack.c.l.b16 %v845
        %v879 = vunpack.c.l.b16 %v846
        %v880 = vunpack.c.l.b16 %v847
        %v881 = vunpack.c.l.b16 %v848
        %v882 = vunpack.c.l.b16 %v849
        %v883 = vunpack.c.l.b16 %v850
        %v884 = vunpack.c.l.b16 %v851
        %v885 = vunpack.c.l.b16 %v852
        %v886 = vunpack.c.l.b16 %v853
        %v887 = vunpack.c.l.b16 %v854
        %v888 = vunpack.c.l.b16 %v855
        %v889 = vpack.c.b16 %v874, %v873
        %v890 = vpack.c.b16 %v876, %v875
        %v891 = vpack.c.b16 %v878, %v877
        %v892 = vpack.c.b16 %v880, %v879
        %v893 = vpack.c.b16 %v882, %v881
        %v894 = vpack.c.b16 %v884, %v883
        %v895 = vpack.c.b16 %v886, %v885
        %v896 = vpack.c.b16 %v888, %v887
        %905 = vmatprep.subr.bf16.mxu0 0
        %906 = vmatpush1.bf16.msra.mxu0 %v896
        %907 = vmatprep.subr.bf16.mxu0 0
        %908 = vmatpush1.bf16.msra.mxu0 %v895
        %909 = vmatprep.subr.bf16.mxu0 0
        %910 = vmatpush1.bf16.msra.mxu0 %v894
        %911 = vmatprep.subr.bf16.mxu0 0
        %912 = vmatpush1.bf16.msra.mxu0 %v893
        %913 = vmatprep.subr.bf16.mxu0 0
        %914 = vmatpush1.bf16.msra.mxu0 %v892
        %915 = vmatprep.subr.bf16.mxu0 0
        %916 = vmatpush1.bf16.msra.mxu0 %v891
        %917 = vmatprep.subr.bf16.mxu0 0
        %918 = vmatpush1.bf16.msra.mxu0 %v890
        %919 = vmatprep.subr.bf16.mxu0 0
        %920 = vmatpush1.bf16.msra.mxu0 %v889
        %921 = vmatprep.subr.bf16.mxu0 0
        %922 = vmatpush2.bf16.msra.mxu0 0
        %923 = vmatprep.subr.bf16.mxu0 0
        %924 = vmatpush2.bf16.msra.mxu0 0
        %925 = vmatprep.subr.bf16.mxu0 0
        %926 = vmatpush2.bf16.msra.mxu0 0
        %927 = vmatprep.subr.bf16.mxu0 0
        %928 = vmatpush2.bf16.msra.mxu0 0
        %929 = vmatprep.subr.bf16.mxu0 0
        %930 = vmatpush2.bf16.msra.mxu0 0
        %931 = vmatprep.subr.bf16.mxu0 0
        %932 = vmatpush2.bf16.msra.mxu0 0
        %933 = vmatprep.subr.bf16.mxu0 0
        %934 = vmatpush2.bf16.msra.mxu0 0
        %935 = vmatprep.subr.bf16.mxu0 0
        %936 = vmatpush2.bf16.msra.mxu0 0
        %937 = vmatprep.mubr.bf16.mxu0 0
        %938 = vmatmul.mubr.bf16.gmra.mxu0 %v856
        %v939 = vpop.f32.mrf.mxu0
        %v940 = vadd.f32 0.0, %v939
        %v941 = vpop.f32.mrf.mxu0
        %v942 = vpop.f32.mrf.mxu0
        %v943 = vpop.f32.mrf.mxu0
        %944 = vdwg.mxu0
        %v945 = vpack.c.bf16 %v940, %v940
        %v946 = vld [vmem:[%s767] sm:$0x1]
        %v948 = vlaneseq
        %v949 = vshrl.u32 %v948, 7
        %v950 = vsub.s32 0, %v949
        %v951 = vrot.slane %v946, %v950
        %953 = vxpose.xlu0.c.b16.start [1/8] %v839, 128
        %954 = vxpose.xlu0.c.b16.cont [2/8] 0, 128
        %955 = vxpose.xlu0.c.b16.cont [3/8] 0, 128
        %956 = vxpose.xlu0.c.b16.cont [4/8] 0, 128
        %957 = vxpose.xlu0.c.b16.cont [5/8] 0, 128
        %958 = vxpose.xlu0.c.b16.cont [6/8] 0, 128
        %959 = vxpose.xlu0.c.b16.cont [7/8] 0, 128
        %960 = vxpose.xlu0.c.b16.end [8/8] 0, 128
        %v961 = vpop.trf.xlu0
        %v962 = vpop.trf.xlu0
        %v963 = vpop.trf.xlu0
        %v964 = vpop.trf.xlu0
        %v965 = vpop.trf.xlu0
        %v966 = vpop.trf.xlu0
        %v967 = vpop.trf.xlu0
        %v968 = vpop.trf.xlu0
        %vm969 = vcmask 64512
        %v971 = vsel %vm969, %v961, 0
        %v974 = vsel %vm969, %v962, 0
        %v977 = vsel %vm969, %v963, 0
        %v980 = vsel %vm969, %v964, 0
        %v983 = vsel %vm969, %v965, 0
        %v986 = vsel %vm969, %v966, 0
        %v989 = vsel %vm969, %v967, 0
        %v992 = vsel %vm969, %v968, 0
        %vm994 = vcmask 1043456
        %v996 = vsel %vm994, %v945, 0
        %998 = vmatprep.subr.bf16.mxu0 0
        %999 = vmatpush1.bf16.msra.mxu0 0
        %1000 = vmatprep.subr.bf16.mxu0 0
        %1001 = vmatpush1.bf16.msra.mxu0 0
        %1002 = vmatprep.subr.bf16.mxu0 0
        %1003 = vmatpush1.bf16.msra.mxu0 0
        %1004 = vmatprep.subr.bf16.mxu0 0
        %1005 = vmatpush1.bf16.msra.mxu0 0
        %1006 = vmatprep.subr.bf16.mxu0 0
        %1007 = vmatpush1.bf16.msra.mxu0 0
        %1008 = vmatprep.subr.bf16.mxu0 0
        %1009 = vmatpush1.bf16.msra.mxu0 0
        %1010 = vmatprep.subr.bf16.mxu0 0
        %1011 = vmatpush1.bf16.msra.mxu0 0
        %1012 = vmatprep.subr.bf16.mxu0 0
        %1013 = vmatpush1.bf16.msra.mxu0 %v996
        %1014 = vmatprep.subr.bf16.mxu0 0
        %1015 = vmatpush2.bf16.msra.mxu0 0
        %1016 = vmatprep.subr.bf16.mxu0 0
        %1017 = vmatpush2.bf16.msra.mxu0 0
        %1018 = vmatprep.subr.bf16.mxu0 0
        %1019 = vmatpush2.bf16.msra.mxu0 0
        %1020 = vmatprep.subr.bf16.mxu0 0
        %1021 = vmatpush2.bf16.msra.mxu0 0
        %1022 = vmatprep.subr.bf16.mxu0 0
        %1023 = vmatpush2.bf16.msra.mxu0 0
        %1024 = vmatprep.subr.bf16.mxu0 0
        %1025 = vmatpush2.bf16.msra.mxu0 0
        %1026 = vmatprep.subr.bf16.mxu0 0
        %1027 = vmatpush2.bf16.msra.mxu0 0
        %1028 = vmatprep.subr.bf16.mxu0 0
        %1029 = vmatpush2.bf16.msra.mxu0 0
        %1030 = vmatprep.mubr.bf16.mxu0 0
        %1031 = vmatmul.mubr.bf16.gmra.mxu0 %v971
        %v1032 = vpop.f32.mrf.mxu0
        %v1033 = vadd.f32 %v951, %v1032
        %v1034 = vpop.f32.mrf.mxu0
        %v1035 = vpop.f32.mrf.mxu0
        %v1036 = vadd.f32 %v951, %v1035
        %v1037 = vpop.f32.mrf.mxu0
        %1038 = vmatprep.mubr.bf16.mxu0 0
        %1039 = vmatmul.mubr.bf16.gmra.mxu0 %v974
        %v1040 = vpop.f32.mrf.mxu0
        %v1041 = vadd.f32 %v951, %v1040
        %v1042 = vpop.f32.mrf.mxu0
        %v1043 = vpop.f32.mrf.mxu0
        %v1044 = vadd.f32 %v951, %v1043
        %v1045 = vpop.f32.mrf.mxu0
        %1046 = vmatprep.mubr.bf16.mxu0 0
        %1047 = vmatmul.mubr.bf16.gmra.mxu0 %v977
        %v1048 = vpop.f32.mrf.mxu0
        %v1049 = vadd.f32 %v951, %v1048
        %v1050 = vpop.f32.mrf.mxu0
        %v1051 = vpop.f32.mrf.mxu0
        %v1052 = vadd.f32 %v951, %v1051
        %v1053 = vpop.f32.mrf.mxu0
        %1054 = vmatprep.mubr.bf16.mxu0 0
        %1055 = vmatmul.mubr.bf16.gmra.mxu0 %v980
        %v1056 = vpop.f32.mrf.mxu0
        %v1057 = vadd.f32 %v951, %v1056
        %v1058 = vpop.f32.mrf.mxu0
        %v1059 = vpop.f32.mrf.mxu0
        %v1060 = vadd.f32 %v951, %v1059
        %v1061 = vpop.f32.mrf.mxu0
        %1062 = vmatprep.mubr.bf16.mxu0 0
        %1063 = vmatmul.mubr.bf16.gmra.mxu0 %v983
        %v1064 = vpop.f32.mrf.mxu0
        %v1065 = vadd.f32 %v951, %v1064
        %v1066 = vpop.f32.mrf.mxu0
        %v1067 = vpop.f32.mrf.mxu0
        %v1068 = vadd.f32 %v951, %v1067
        %v1069 = vpop.f32.mrf.mxu0
        %1070 = vmatprep.mubr.bf16.mxu0 0
        %1071 = vmatmul.mubr.bf16.gmra.mxu0 %v986
        %v1072 = vpop.f32.mrf.mxu0
        %v1073 = vadd.f32 %v951, %v1072
        %v1074 = vpop.f32.mrf.mxu0
        %v1075 = vpop.f32.mrf.mxu0
        %v1076 = vadd.f32 %v951, %v1075
        %v1077 = vpop.f32.mrf.mxu0
        %1078 = vmatprep.mubr.bf16.mxu0 0
        %1079 = vmatmul.mubr.bf16.gmra.mxu0 %v989
        %v1080 = vpop.f32.mrf.mxu0
        %v1081 = vadd.f32 %v951, %v1080
        %v1082 = vpop.f32.mrf.mxu0
        %v1083 = vpop.f32.mrf.mxu0
        %v1084 = vadd.f32 %v951, %v1083
        %v1085 = vpop.f32.mrf.mxu0
        %1086 = vmatprep.mubr.bf16.mxu0 0
        %1087 = vmatmul.mubr.bf16.gmra.mxu0 %v992
        %v1088 = vpop.f32.mrf.mxu0
        %v1089 = vadd.f32 %v951, %v1088
        %v1090 = vpop.f32.mrf.mxu0
        %v1091 = vpop.f32.mrf.mxu0
        %v1092 = vadd.f32 %v951, %v1091
        %v1093 = vpop.f32.mrf.mxu0
        %1094 = vdwg.mxu0
        %vm1095 = vcmp.gt.f32.partialorder %v1033, 0.0
        %vm1096 = vcmp.gt.f32.partialorder %v1036, 0.0
        %vm1097 = vcmp.gt.f32.partialorder %v1041, 0.0
        %vm1098 = vcmp.gt.f32.partialorder %v1044, 0.0
        %vm1099 = vcmp.gt.f32.partialorder %v1049, 0.0
        %vm1100 = vcmp.gt.f32.partialorder %v1052, 0.0
        %vm1101 = vcmp.gt.f32.partialorder %v1057, 0.0
        %vm1102 = vcmp.gt.f32.partialorder %v1060, 0.0
        %vm1103 = vcmp.gt.f32.partialorder %v1065, 0.0
        %vm1104 = vcmp.gt.f32.partialorder %v1068, 0.0
        %vm1105 = vcmp.gt.f32.partialorder %v1073, 0.0
        %vm1106 = vcmp.gt.f32.partialorder %v1076, 0.0
        %vm1107 = vcmp.gt.f32.partialorder %v1081, 0.0
        %vm1108 = vcmp.gt.f32.partialorder %v1084, 0.0
        %vm1109 = vcmp.gt.f32.partialorder %v1089, 0.0
        %vm1110 = vcmp.gt.f32.partialorder %v1092, 0.0
        %v1111 = vmul.f32 %v1033, 0.2
        %v1112 = vmul.f32 %v1036, 0.2
        %v1113 = vmul.f32 %v1041, 0.2
        %v1114 = vmul.f32 %v1044, 0.2
        %v1115 = vmul.f32 %v1049, 0.2
        %v1116 = vmul.f32 %v1052, 0.2
        %v1117 = vmul.f32 %v1057, 0.2
        %v1118 = vmul.f32 %v1060, 0.2
        %v1119 = vmul.f32 %v1065, 0.2
        %v1120 = vmul.f32 %v1068, 0.2
        %v1121 = vmul.f32 %v1073, 0.2
        %v1122 = vmul.f32 %v1076, 0.2
        %v1123 = vmul.f32 %v1081, 0.2
        %v1124 = vmul.f32 %v1084, 0.2
        %v1125 = vmul.f32 %v1089, 0.2
        %v1126 = vmul.f32 %v1092, 0.2
        %v1127 = vsel %vm1095, %v1033, %v1111
        %v1128 = vsel %vm1096, %v1036, %v1112
        %v1129 = vsel %vm1097, %v1041, %v1113
        %v1130 = vsel %vm1098, %v1044, %v1114
        %v1131 = vsel %vm1099, %v1049, %v1115
        %v1132 = vsel %vm1100, %v1052, %v1116
        %v1133 = vsel %vm1101, %v1057, %v1117
        %v1134 = vsel %vm1102, %v1060, %v1118
        %v1135 = vsel %vm1103, %v1065, %v1119
        %v1136 = vsel %vm1104, %v1068, %v1120
        %v1137 = vsel %vm1105, %v1073, %v1121
        %v1138 = vsel %vm1106, %v1076, %v1122
        %v1139 = vsel %vm1107, %v1081, %v1123
        %v1140 = vsel %vm1108, %v1084, %v1124
        %v1141 = vsel %vm1109, %v1089, %v1125
        %v1142 = vsel %vm1110, %v1092, %v1126
        %v1143 = vpack.c.bf16 %v824, %v823
        %v1144 = vpack.c.bf16 %v826, %v825
        %v1145 = vpack.c.bf16 %v828, %v827
        %v1146 = vpack.c.bf16 %v830, %v829
        %v1147 = vpack.c.bf16 %v832, %v831
        %v1148 = vpack.c.bf16 %v834, %v833
        %v1149 = vpack.c.bf16 %v836, %v835
        %v1150 = vpack.c.bf16 %v838, %v837
        %1151 = vmatprep.subr.bf16.mxu0 0
        %1152 = vmatpush1.bf16.msra.mxu0 %v1150
        %1153 = vmatprep.subr.bf16.mxu0 0
        %1154 = vmatpush1.bf16.msra.mxu0 %v1149
        %1155 = vmatprep.subr.bf16.mxu0 0
        %1156 = vmatpush1.bf16.msra.mxu0 %v1148
        %1157 = vmatprep.subr.bf16.mxu0 0
        %1158 = vmatpush1.bf16.msra.mxu0 %v1147
        %1159 = vmatprep.subr.bf16.mxu0 0
        %1160 = vmatpush1.bf16.msra.mxu0 %v1146
        %1161 = vmatprep.subr.bf16.mxu0 0
        %1162 = vmatpush1.bf16.msra.mxu0 %v1145
        %1163 = vmatprep.subr.bf16.mxu0 0
        %1164 = vmatpush1.bf16.msra.mxu0 %v1144
        %1165 = vmatprep.subr.bf16.mxu0 0
        %1166 = vmatpush1.bf16.msra.mxu0 %v1143
        %1167 = vmatprep.subr.bf16.mxu0 0
        %1168 = vmatpush2.bf16.msra.mxu0 0
        %1169 = vmatprep.subr.bf16.mxu0 0
        %1170 = vmatpush2.bf16.msra.mxu0 0
        %1171 = vmatprep.subr.bf16.mxu0 0
        %1172 = vmatpush2.bf16.msra.mxu0 0
        %1173 = vmatprep.subr.bf16.mxu0 0
        %1174 = vmatpush2.bf16.msra.mxu0 0
        %1175 = vmatprep.subr.bf16.mxu0 0
        %1176 = vmatpush2.bf16.msra.mxu0 0
        %1177 = vmatprep.subr.bf16.mxu0 0
        %1178 = vmatpush2.bf16.msra.mxu0 0
        %1179 = vmatprep.subr.bf16.mxu0 0
        %1180 = vmatpush2.bf16.msra.mxu0 0
        %1181 = vmatprep.subr.bf16.mxu0 0
        %1182 = vmatpush2.bf16.msra.mxu0 0
        %1183 = vmatprep.mubr.bf16.mxu0 0
        %1184 = vmatmul.mubr.bf16.gmra.mxu0 %v839
        %v1185 = vpop.f32.mrf.mxu0
        %v1186 = vadd.f32 0.0, %v1185
        %v1187 = vpop.f32.mrf.mxu0
        %v1188 = vpop.f32.mrf.mxu0
        %v1189 = vpop.f32.mrf.mxu0
        %1190 = vdwg.mxu0
        %v1191 = vld [vmem:[%s637] sm:$0xf]
        %v1192 = vld [vmem:[%s637 + $0x4] sm:$0xf]
        %v1193 = vld [vmem:[%s637 + $0x8] sm:$0xf]
        %v1194 = vld [vmem:[%s637 + $0xc] sm:$0xf]
        %v1195 = vld [vmem:[%s637 + $0x10] sm:$0xf]
        %v1196 = vld [vmem:[%s637 + $0x14] sm:$0xf]
        %v1197 = vld [vmem:[%s637 + $0x18] sm:$0xf]
        %v1198 = vld [vmem:[%s637 + $0x1c] sm:$0xf]
        %v1199 = vld [vmem:[%s637 + $0x20] sm:$0xf]
        %v1200 = vld [vmem:[%s637 + $0x24] sm:$0xf]
        %v1201 = vld [vmem:[%s637 + $0x28] sm:$0xf]
        %v1202 = vld [vmem:[%s637 + $0x2c] sm:$0xf]
        %v1203 = vld [vmem:[%s637 + $0x30] sm:$0xf]
        %v1204 = vld [vmem:[%s637 + $0x34] sm:$0xf]
        %v1205 = vld [vmem:[%s637 + $0x38] sm:$0xf]
        %v1206 = vld [vmem:[%s637 + $0x3c] sm:$0xf]
        %v1207 = vpack.c.bf16 %v1186, %v1186
        %v1208 = vld [vmem:[%s770] sm:$0x1]
        %v1210 = vlaneseq
        %v1211 = vshrl.u32 %v1210, 7
        %v1212 = vsub.s32 0, %v1211
        %v1213 = vrot.slane %v1208, %v1212
        %v1231 = vunpack.c.l.b16 %v1191
        %v1232 = vunpack.c.l.b16 %v1192
        %v1233 = vunpack.c.l.b16 %v1193
        %v1234 = vunpack.c.l.b16 %v1194
        %v1235 = vunpack.c.l.b16 %v1195
        %v1236 = vunpack.c.l.b16 %v1196
        %v1237 = vunpack.c.l.b16 %v1197
        %v1238 = vunpack.c.l.b16 %v1198
        %v1239 = vunpack.c.l.b16 %v1199
        %v1240 = vunpack.c.l.b16 %v1200
        %v1241 = vunpack.c.l.b16 %v1201
        %v1242 = vunpack.c.l.b16 %v1202
        %v1243 = vunpack.c.l.b16 %v1203
        %v1244 = vunpack.c.l.b16 %v1204
        %v1245 = vunpack.c.l.b16 %v1205
        %v1246 = vunpack.c.l.b16 %v1206
        %v1247 = vpack.c.b16 %v1232, %v1231
        %v1248 = vpack.c.b16 %v1234, %v1233
        %v1249 = vpack.c.b16 %v1236, %v1235
        %v1250 = vpack.c.b16 %v1238, %v1237
        %v1251 = vpack.c.b16 %v1240, %v1239
        %v1252 = vpack.c.b16 %v1242, %v1241
        %v1253 = vpack.c.b16 %v1244, %v1243
        %v1254 = vpack.c.b16 %v1246, %v1245
        %1263 = vmatprep.subr.bf16.mxu0 0
        %1264 = vmatpush1.bf16.msra.mxu0 %v1254
        %1265 = vmatprep.subr.bf16.mxu0 0
        %1266 = vmatpush1.bf16.msra.mxu0 %v1253
        %1267 = vmatprep.subr.bf16.mxu0 0
        %1268 = vmatpush1.bf16.msra.mxu0 %v1252
        %1269 = vmatprep.subr.bf16.mxu0 0
        %1270 = vmatpush1.bf16.msra.mxu0 %v1251
        %1271 = vmatprep.subr.bf16.mxu0 0
        %1272 = vmatpush1.bf16.msra.mxu0 %v1250
        %1273 = vmatprep.subr.bf16.mxu0 0
        %1274 = vmatpush1.bf16.msra.mxu0 %v1249
        %1275 = vmatprep.subr.bf16.mxu0 0
        %1276 = vmatpush1.bf16.msra.mxu0 %v1248
        %1277 = vmatprep.subr.bf16.mxu0 0
        %1278 = vmatpush1.bf16.msra.mxu0 %v1247
        %1279 = vmatprep.subr.bf16.mxu0 0
        %1280 = vmatpush2.bf16.msra.mxu0 0
        %1281 = vmatprep.subr.bf16.mxu0 0
        %1282 = vmatpush2.bf16.msra.mxu0 0
        %1283 = vmatprep.subr.bf16.mxu0 0
        %1284 = vmatpush2.bf16.msra.mxu0 0
        %1285 = vmatprep.subr.bf16.mxu0 0
        %1286 = vmatpush2.bf16.msra.mxu0 0
        %1287 = vmatprep.subr.bf16.mxu0 0
        %1288 = vmatpush2.bf16.msra.mxu0 0
        %1289 = vmatprep.subr.bf16.mxu0 0
        %1290 = vmatpush2.bf16.msra.mxu0 0
        %1291 = vmatprep.subr.bf16.mxu0 0
        %1292 = vmatpush2.bf16.msra.mxu0 0
        %1293 = vmatprep.subr.bf16.mxu0 0
        %1294 = vmatpush2.bf16.msra.mxu0 0
        %1295 = vmatprep.mubr.bf16.mxu0 0
        %1296 = vmatmul.mubr.bf16.gmra.mxu0 %v1207
        %v1297 = vpop.f32.mrf.mxu0
        %v1298 = vadd.f32 %v1213, %v1297
        %v1299 = vpop.f32.mrf.mxu0
        %v1300 = vpop.f32.mrf.mxu0
        %v1301 = vpop.f32.mrf.mxu0
        %1302 = vdwg.mxu0
        %vm1303 = vcmp.gt.f32.partialorder %v1298, 0.0
        %v1304 = vmul.f32 %v1298, 0.2
        %v1305 = vsel %vm1303, %v1298, %v1304
        %v1306 = vpack.c.bf16 %v1128, %v1127
        %v1307 = vpack.c.bf16 %v1130, %v1129
        %v1308 = vpack.c.bf16 %v1132, %v1131
        %v1309 = vpack.c.bf16 %v1134, %v1133
        %v1310 = vpack.c.bf16 %v1136, %v1135
        %v1311 = vpack.c.bf16 %v1138, %v1137
        %v1312 = vpack.c.bf16 %v1140, %v1139
        %v1313 = vpack.c.bf16 %v1142, %v1141
        %1314 = vmatprep.subr.bf16.mxu0 0
        %1315 = vmatpush1.bf16.msra.mxu0 %v1313
        %1316 = vmatprep.subr.bf16.mxu0 0
        %1317 = vmatpush1.bf16.msra.mxu0 %v1312
        %1318 = vmatprep.subr.bf16.mxu0 0
        %1319 = vmatpush1.bf16.msra.mxu0 %v1311
        %1320 = vmatprep.subr.bf16.mxu0 0
        %1321 = vmatpush1.bf16.msra.mxu0 %v1310
        %1322 = vmatprep.subr.bf16.mxu0 0
        %1323 = vmatpush1.bf16.msra.mxu0 %v1309
        %1324 = vmatprep.subr.bf16.mxu0 0
        %1325 = vmatpush1.bf16.msra.mxu0 %v1308
        %1326 = vmatprep.subr.bf16.mxu0 0
        %1327 = vmatpush1.bf16.msra.mxu0 %v1307
        %1328 = vmatprep.subr.bf16.mxu0 0
        %1329 = vmatpush1.bf16.msra.mxu0 %v1306
        %1330 = vmatprep.subr.bf16.mxu0 0
        %1331 = vmatpush2.bf16.msra.mxu0 0
        %1332 = vmatprep.subr.bf16.mxu0 0
        %1333 = vmatpush2.bf16.msra.mxu0 0
        %1334 = vmatprep.subr.bf16.mxu0 0
        %1335 = vmatpush2.bf16.msra.mxu0 0
        %1336 = vmatprep.subr.bf16.mxu0 0
        %1337 = vmatpush2.bf16.msra.mxu0 0
        %1338 = vmatprep.subr.bf16.mxu0 0
        %1339 = vmatpush2.bf16.msra.mxu0 0
        %1340 = vmatprep.subr.bf16.mxu0 0
        %1341 = vmatpush2.bf16.msra.mxu0 0
        %1342 = vmatprep.subr.bf16.mxu0 0
        %1343 = vmatpush2.bf16.msra.mxu0 0
        %1344 = vmatprep.subr.bf16.mxu0 0
        %1345 = vmatpush2.bf16.msra.mxu0 0
        %1346 = vmatprep.mubr.bf16.mxu0 0
        %1347 = vmatmul.mubr.bf16.gmra.mxu0 %v839
        %v1348 = vpop.f32.mrf.mxu0
        %v1349 = vadd.f32 0.0, %v1348
        %v1350 = vpop.f32.mrf.mxu0
        %v1351 = vpop.f32.mrf.mxu0
        %v1352 = vpop.f32.mrf.mxu0
        %1353 = vdwg.mxu0
        %v1354 = vld [vmem:[%s646] sm:$0xf]
        %v1355 = vld [vmem:[%s646 + $0x4] sm:$0xf]
        %v1356 = vld [vmem:[%s646 + $0x8] sm:$0xf]
        %v1357 = vld [vmem:[%s646 + $0xc] sm:$0xf]
        %v1358 = vld [vmem:[%s646 + $0x10] sm:$0xf]
        %v1359 = vld [vmem:[%s646 + $0x14] sm:$0xf]
        %v1360 = vld [vmem:[%s646 + $0x18] sm:$0xf]
        %v1361 = vld [vmem:[%s646 + $0x1c] sm:$0xf]
        %v1362 = vld [vmem:[%s646 + $0x20] sm:$0xf]
        %v1363 = vld [vmem:[%s646 + $0x24] sm:$0xf]
        %v1364 = vld [vmem:[%s646 + $0x28] sm:$0xf]
        %v1365 = vld [vmem:[%s646 + $0x2c] sm:$0xf]
        %v1366 = vld [vmem:[%s646 + $0x30] sm:$0xf]
        %v1367 = vld [vmem:[%s646 + $0x34] sm:$0xf]
        %v1368 = vld [vmem:[%s646 + $0x38] sm:$0xf]
        %v1369 = vld [vmem:[%s646 + $0x3c] sm:$0xf]
        %v1370 = vpack.c.bf16 %v1349, %v1349
        %v1371 = vld [vmem:[%s773] sm:$0x1]
        %v1373 = vlaneseq
        %v1374 = vshrl.u32 %v1373, 7
        %v1375 = vsub.s32 0, %v1374
        %v1376 = vrot.slane %v1371, %v1375
        %v1394 = vunpack.c.l.b16 %v1354
        %v1395 = vunpack.c.l.b16 %v1355
        %v1396 = vunpack.c.l.b16 %v1356
        %v1397 = vunpack.c.l.b16 %v1357
        %v1398 = vunpack.c.l.b16 %v1358
        %v1399 = vunpack.c.l.b16 %v1359
        %v1400 = vunpack.c.l.b16 %v1360
        %v1401 = vunpack.c.l.b16 %v1361
        %v1402 = vunpack.c.l.b16 %v1362
        %v1403 = vunpack.c.l.b16 %v1363
        %v1404 = vunpack.c.l.b16 %v1364
        %v1405 = vunpack.c.l.b16 %v1365
        %v1406 = vunpack.c.l.b16 %v1366
        %v1407 = vunpack.c.l.b16 %v1367
        %v1408 = vunpack.c.l.b16 %v1368
        %v1409 = vunpack.c.l.b16 %v1369
        %v1410 = vpack.c.b16 %v1395, %v1394
        %v1411 = vpack.c.b16 %v1397, %v1396
        %v1412 = vpack.c.b16 %v1399, %v1398
        %v1413 = vpack.c.b16 %v1401, %v1400
        %v1414 = vpack.c.b16 %v1403, %v1402
        %v1415 = vpack.c.b16 %v1405, %v1404
        %v1416 = vpack.c.b16 %v1407, %v1406
        %v1417 = vpack.c.b16 %v1409, %v1408
        %1426 = vmatprep.subr.bf16.mxu0 0
        %1427 = vmatpush1.bf16.msra.mxu0 %v1417
        %1428 = vmatprep.subr.bf16.mxu0 0
        %1429 = vmatpush1.bf16.msra.mxu0 %v1416
        %1430 = vmatprep.subr.bf16.mxu0 0
        %1431 = vmatpush1.bf16.msra.mxu0 %v1415
        %1432 = vmatprep.subr.bf16.mxu0 0
        %1433 = vmatpush1.bf16.msra.mxu0 %v1414
        %1434 = vmatprep.subr.bf16.mxu0 0
        %1435 = vmatpush1.bf16.msra.mxu0 %v1413
        %1436 = vmatprep.subr.bf16.mxu0 0
        %1437 = vmatpush1.bf16.msra.mxu0 %v1412
        %1438 = vmatprep.subr.bf16.mxu0 0
        %1439 = vmatpush1.bf16.msra.mxu0 %v1411
        %1440 = vmatprep.subr.bf16.mxu0 0
        %1441 = vmatpush1.bf16.msra.mxu0 %v1410
        %1442 = vmatprep.subr.bf16.mxu0 0
        %1443 = vmatpush2.bf16.msra.mxu0 0
        %1444 = vmatprep.subr.bf16.mxu0 0
        %1445 = vmatpush2.bf16.msra.mxu0 0
        %1446 = vmatprep.subr.bf16.mxu0 0
        %1447 = vmatpush2.bf16.msra.mxu0 0
        %1448 = vmatprep.subr.bf16.mxu0 0
        %1449 = vmatpush2.bf16.msra.mxu0 0
        %1450 = vmatprep.subr.bf16.mxu0 0
        %1451 = vmatpush2.bf16.msra.mxu0 0
        %1452 = vmatprep.subr.bf16.mxu0 0
        %1453 = vmatpush2.bf16.msra.mxu0 0
        %1454 = vmatprep.subr.bf16.mxu0 0
        %1455 = vmatpush2.bf16.msra.mxu0 0
        %1456 = vmatprep.subr.bf16.mxu0 0
        %1457 = vmatpush2.bf16.msra.mxu0 0
        %1458 = vmatprep.mubr.bf16.mxu0 0
        %1459 = vmatmul.mubr.bf16.gmra.mxu0 %v1370
        %v1460 = vpop.f32.mrf.mxu0
        %v1461 = vadd.f32 %v1376, %v1460
        %v1462 = vpop.f32.mrf.mxu0
        %v1463 = vpop.f32.mrf.mxu0
        %v1464 = vpop.f32.mrf.mxu0
        %1465 = vdwg.mxu0
        %vm1466 = vcmp.gt.f32.partialorder %v1461, 0.0
        %v1467 = vmul.f32 %v1461, 0.2
        %v1468 = vsel %vm1466, %v1461, %v1467
        %v1469 = vld [vmem:[%s655] sm:$0xf]
        %v1470 = vld [vmem:[%s655 + $0x4] sm:$0xf]
        %v1471 = vld [vmem:[%s655 + $0x8] sm:$0xf]
        %v1472 = vld [vmem:[%s655 + $0xc] sm:$0xf]
        %v1473 = vld [vmem:[%s655 + $0x10] sm:$0xf]
        %v1474 = vld [vmem:[%s655 + $0x14] sm:$0xf]
        %v1475 = vld [vmem:[%s655 + $0x18] sm:$0xf]
        %v1476 = vld [vmem:[%s655 + $0x1c] sm:$0xf]
        %v1477 = vld [vmem:[%s655 + $0x20] sm:$0xf]
        %v1478 = vld [vmem:[%s655 + $0x24] sm:$0xf]
        %v1479 = vld [vmem:[%s655 + $0x28] sm:$0xf]
        %v1480 = vld [vmem:[%s655 + $0x2c] sm:$0xf]
        %v1481 = vld [vmem:[%s655 + $0x30] sm:$0xf]
        %v1482 = vld [vmem:[%s655 + $0x34] sm:$0xf]
        %v1483 = vld [vmem:[%s655 + $0x38] sm:$0xf]
        %v1484 = vld [vmem:[%s655 + $0x3c] sm:$0xf]
        %v1485 = vpack.c.bf16 %v1305, %v1305
        %v1502 = vunpack.c.l.b16 %v1469
        %v1503 = vunpack.c.l.b16 %v1470
        %v1504 = vunpack.c.l.b16 %v1471
        %v1505 = vunpack.c.l.b16 %v1472
        %v1506 = vunpack.c.l.b16 %v1473
        %v1507 = vunpack.c.l.b16 %v1474
        %v1508 = vunpack.c.l.b16 %v1475
        %v1509 = vunpack.c.l.b16 %v1476
        %v1510 = vunpack.c.l.b16 %v1477
        %v1511 = vunpack.c.l.b16 %v1478
        %v1512 = vunpack.c.l.b16 %v1479
        %v1513 = vunpack.c.l.b16 %v1480
        %v1514 = vunpack.c.l.b16 %v1481
        %v1515 = vunpack.c.l.b16 %v1482
        %v1516 = vunpack.c.l.b16 %v1483
        %v1517 = vunpack.c.l.b16 %v1484
        %v1518 = vpack.c.b16 %v1503, %v1502
        %v1519 = vpack.c.b16 %v1505, %v1504
        %v1520 = vpack.c.b16 %v1507, %v1506
        %v1521 = vpack.c.b16 %v1509, %v1508
        %v1522 = vpack.c.b16 %v1511, %v1510
        %v1523 = vpack.c.b16 %v1513, %v1512
        %v1524 = vpack.c.b16 %v1515, %v1514
        %v1525 = vpack.c.b16 %v1517, %v1516
        %1534 = vmatprep.subr.bf16.mxu0 0
        %1535 = vmatpush1.bf16.msra.mxu0 %v1525
        %1536 = vmatprep.subr.bf16.mxu0 0
        %1537 = vmatpush1.bf16.msra.mxu0 %v1524
        %1538 = vmatprep.subr.bf16.mxu0 0
        %1539 = vmatpush1.bf16.msra.mxu0 %v1523
        %1540 = vmatprep.subr.bf16.mxu0 0
        %1541 = vmatpush1.bf16.msra.mxu0 %v1522
        %1542 = vmatprep.subr.bf16.mxu0 0
        %1543 = vmatpush1.bf16.msra.mxu0 %v1521
        %1544 = vmatprep.subr.bf16.mxu0 0
        %1545 = vmatpush1.bf16.msra.mxu0 %v1520
        %1546 = vmatprep.subr.bf16.mxu0 0
        %1547 = vmatpush1.bf16.msra.mxu0 %v1519
        %1548 = vmatprep.subr.bf16.mxu0 0
        %1549 = vmatpush1.bf16.msra.mxu0 %v1518
        %1550 = vmatprep.subr.bf16.mxu0 0
        %1551 = vmatpush2.bf16.msra.mxu0 0
        %1552 = vmatprep.subr.bf16.mxu0 0
        %1553 = vmatpush2.bf16.msra.mxu0 0
        %1554 = vmatprep.subr.bf16.mxu0 0
        %1555 = vmatpush2.bf16.msra.mxu0 0
        %1556 = vmatprep.subr.bf16.mxu0 0
        %1557 = vmatpush2.bf16.msra.mxu0 0
        %1558 = vmatprep.subr.bf16.mxu0 0
        %1559 = vmatpush2.bf16.msra.mxu0 0
        %1560 = vmatprep.subr.bf16.mxu0 0
        %1561 = vmatpush2.bf16.msra.mxu0 0
        %1562 = vmatprep.subr.bf16.mxu0 0
        %1563 = vmatpush2.bf16.msra.mxu0 0
        %1564 = vmatprep.subr.bf16.mxu0 0
        %1565 = vmatpush2.bf16.msra.mxu0 0
        %1566 = vmatprep.mubr.bf16.mxu0 0
        %1567 = vmatmul.mubr.bf16.gmra.mxu0 %v1485
        %v1568 = vpop.f32.mrf.mxu0
        %v1569 = vadd.f32 0.0, %v1568
        %v1570 = vpop.f32.mrf.mxu0
        %v1571 = vpop.f32.mrf.mxu0
        %v1572 = vpop.f32.mrf.mxu0
        %1573 = vdwg.mxu0
        %v1574 = vpack.c.bf16 %v1569, %v1569
        %v1575 = vld [vmem:[%s776] sm:$0x1]
        %v1577 = vlaneseq
        %v1578 = vshrl.u32 %v1577, 7
        %v1579 = vsub.s32 0, %v1578
        %v1580 = vrot.slane %v1575, %v1579
        %v1583 = vsel %vm994, %v1574, 0
        %1585 = vmatprep.subr.bf16.mxu0 0
        %1586 = vmatpush1.bf16.msra.mxu0 0
        %1587 = vmatprep.subr.bf16.mxu0 0
        %1588 = vmatpush1.bf16.msra.mxu0 0
        %1589 = vmatprep.subr.bf16.mxu0 0
        %1590 = vmatpush1.bf16.msra.mxu0 0
        %1591 = vmatprep.subr.bf16.mxu0 0
        %1592 = vmatpush1.bf16.msra.mxu0 0
        %1593 = vmatprep.subr.bf16.mxu0 0
        %1594 = vmatpush1.bf16.msra.mxu0 0
        %1595 = vmatprep.subr.bf16.mxu0 0
        %1596 = vmatpush1.bf16.msra.mxu0 0
        %1597 = vmatprep.subr.bf16.mxu0 0
        %1598 = vmatpush1.bf16.msra.mxu0 0
        %1599 = vmatprep.subr.bf16.mxu0 0
        %1600 = vmatpush1.bf16.msra.mxu0 %v1583
        %1601 = vmatprep.subr.bf16.mxu0 0
        %1602 = vmatpush2.bf16.msra.mxu0 0
        %1603 = vmatprep.subr.bf16.mxu0 0
        %1604 = vmatpush2.bf16.msra.mxu0 0
        %1605 = vmatprep.subr.bf16.mxu0 0
        %1606 = vmatpush2.bf16.msra.mxu0 0
        %1607 = vmatprep.subr.bf16.mxu0 0
        %1608 = vmatpush2.bf16.msra.mxu0 0
        %1609 = vmatprep.subr.bf16.mxu0 0
        %1610 = vmatpush2.bf16.msra.mxu0 0
        %1611 = vmatprep.subr.bf16.mxu0 0
        %1612 = vmatpush2.bf16.msra.mxu0 0
        %1613 = vmatprep.subr.bf16.mxu0 0
        %1614 = vmatpush2.bf16.msra.mxu0 0
        %1615 = vmatprep.subr.bf16.mxu0 0
        %1616 = vmatpush2.bf16.msra.mxu0 0
        %1617 = vmatprep.mubr.bf16.mxu0 0
        %1618 = vmatmul.mubr.bf16.gmra.mxu0 %v971
        %v1619 = vpop.f32.mrf.mxu0
        %v1620 = vadd.f32 %v1580, %v1619
        %v1621 = vpop.f32.mrf.mxu0
        %v1622 = vpop.f32.mrf.mxu0
        %v1623 = vadd.f32 %v1580, %v1622
        %v1624 = vpop.f32.mrf.mxu0
        %1625 = vmatprep.mubr.bf16.mxu0 0
        %1626 = vmatmul.mubr.bf16.gmra.mxu0 %v974
        %v1627 = vpop.f32.mrf.mxu0
        %v1628 = vadd.f32 %v1580, %v1627
        %v1629 = vpop.f32.mrf.mxu0
        %v1630 = vpop.f32.mrf.mxu0
        %v1631 = vadd.f32 %v1580, %v1630
        %v1632 = vpop.f32.mrf.mxu0
        %1633 = vmatprep.mubr.bf16.mxu0 0
        %1634 = vmatmul.mubr.bf16.gmra.mxu0 %v977
        %v1635 = vpop.f32.mrf.mxu0
        %v1636 = vadd.f32 %v1580, %v1635
        %v1637 = vpop.f32.mrf.mxu0
        %v1638 = vpop.f32.mrf.mxu0
        %v1639 = vadd.f32 %v1580, %v1638
        %v1640 = vpop.f32.mrf.mxu0
        %1641 = vmatprep.mubr.bf16.mxu0 0
        %1642 = vmatmul.mubr.bf16.gmra.mxu0 %v980
        %v1643 = vpop.f32.mrf.mxu0
        %v1644 = vadd.f32 %v1580, %v1643
        %v1645 = vpop.f32.mrf.mxu0
        %v1646 = vpop.f32.mrf.mxu0
        %v1647 = vadd.f32 %v1580, %v1646
        %v1648 = vpop.f32.mrf.mxu0
        %1649 = vmatprep.mubr.bf16.mxu0 0
        %1650 = vmatmul.mubr.bf16.gmra.mxu0 %v983
        %v1651 = vpop.f32.mrf.mxu0
        %v1652 = vadd.f32 %v1580, %v1651
        %v1653 = vpop.f32.mrf.mxu0
        %v1654 = vpop.f32.mrf.mxu0
        %v1655 = vadd.f32 %v1580, %v1654
        %v1656 = vpop.f32.mrf.mxu0
        %1657 = vmatprep.mubr.bf16.mxu0 0
        %1658 = vmatmul.mubr.bf16.gmra.mxu0 %v986
        %v1659 = vpop.f32.mrf.mxu0
        %v1660 = vadd.f32 %v1580, %v1659
        %v1661 = vpop.f32.mrf.mxu0
        %v1662 = vpop.f32.mrf.mxu0
        %v1663 = vadd.f32 %v1580, %v1662
        %v1664 = vpop.f32.mrf.mxu0
        %1665 = vmatprep.mubr.bf16.mxu0 0
        %1666 = vmatmul.mubr.bf16.gmra.mxu0 %v989
        %v1667 = vpop.f32.mrf.mxu0
        %v1668 = vadd.f32 %v1580, %v1667
        %v1669 = vpop.f32.mrf.mxu0
        %v1670 = vpop.f32.mrf.mxu0
        %v1671 = vadd.f32 %v1580, %v1670
        %v1672 = vpop.f32.mrf.mxu0
        %1673 = vmatprep.mubr.bf16.mxu0 0
        %1674 = vmatmul.mubr.bf16.gmra.mxu0 %v992
        %v1675 = vpop.f32.mrf.mxu0
        %v1676 = vadd.f32 %v1580, %v1675
        %v1677 = vpop.f32.mrf.mxu0
        %v1678 = vpop.f32.mrf.mxu0
        %v1679 = vadd.f32 %v1580, %v1678
        %v1680 = vpop.f32.mrf.mxu0
        %1681 = vdwg.mxu0
        %vm1682 = vcmp.gt.f32.partialorder %v1620, 0.0
        %vm1683 = vcmp.gt.f32.partialorder %v1623, 0.0
        %vm1684 = vcmp.gt.f32.partialorder %v1628, 0.0
        %vm1685 = vcmp.gt.f32.partialorder %v1631, 0.0
        %vm1686 = vcmp.gt.f32.partialorder %v1636, 0.0
        %vm1687 = vcmp.gt.f32.partialorder %v1639, 0.0
        %vm1688 = vcmp.gt.f32.partialorder %v1644, 0.0
        %vm1689 = vcmp.gt.f32.partialorder %v1647, 0.0
        %vm1690 = vcmp.gt.f32.partialorder %v1652, 0.0
        %vm1691 = vcmp.gt.f32.partialorder %v1655, 0.0
        %vm1692 = vcmp.gt.f32.partialorder %v1660, 0.0
        %vm1693 = vcmp.gt.f32.partialorder %v1663, 0.0
        %vm1694 = vcmp.gt.f32.partialorder %v1668, 0.0
        %vm1695 = vcmp.gt.f32.partialorder %v1671, 0.0
        %vm1696 = vcmp.gt.f32.partialorder %v1676, 0.0
        %vm1697 = vcmp.gt.f32.partialorder %v1679, 0.0
        %v1698 = vmul.f32 %v1620, 0.2
        %v1699 = vmul.f32 %v1623, 0.2
        %v1700 = vmul.f32 %v1628, 0.2
        %v1701 = vmul.f32 %v1631, 0.2
        %v1702 = vmul.f32 %v1636, 0.2
        %v1703 = vmul.f32 %v1639, 0.2
        %v1704 = vmul.f32 %v1644, 0.2
        %v1705 = vmul.f32 %v1647, 0.2
        %v1706 = vmul.f32 %v1652, 0.2
        %v1707 = vmul.f32 %v1655, 0.2
        %v1708 = vmul.f32 %v1660, 0.2
        %v1709 = vmul.f32 %v1663, 0.2
        %v1710 = vmul.f32 %v1668, 0.2
        %v1711 = vmul.f32 %v1671, 0.2
        %v1712 = vmul.f32 %v1676, 0.2
        %v1713 = vmul.f32 %v1679, 0.2
        %v1714 = vsel %vm1682, %v1620, %v1698
        %v1715 = vsel %vm1683, %v1623, %v1699
        %v1716 = vsel %vm1684, %v1628, %v1700
        %v1717 = vsel %vm1685, %v1631, %v1701
        %v1718 = vsel %vm1686, %v1636, %v1702
        %v1719 = vsel %vm1687, %v1639, %v1703
        %v1720 = vsel %vm1688, %v1644, %v1704
        %v1721 = vsel %vm1689, %v1647, %v1705
        %v1722 = vsel %vm1690, %v1652, %v1706
        %v1723 = vsel %vm1691, %v1655, %v1707
        %v1724 = vsel %vm1692, %v1660, %v1708
        %v1725 = vsel %vm1693, %v1663, %v1709
        %v1726 = vsel %vm1694, %v1668, %v1710
        %v1727 = vsel %vm1695, %v1671, %v1711
        %v1728 = vsel %vm1696, %v1676, %v1712
        %v1729 = vsel %vm1697, %v1679, %v1713
        %1730 = vrot.lane.b32.xlu0 %v822, 32
        %v1731 = vpop.permute.xlu0 %1730
        %v1732 = vadd.f32 %v1468, %v1731
        %v1733 = vld [vmem:[%s664] sm:$0xf]
        %v1734 = vld [vmem:[%s664 + $0x4] sm:$0xf]
        %v1735 = vld [vmem:[%s664 + $0x8] sm:$0xf]
        %v1736 = vld [vmem:[%s664 + $0xc] sm:$0xf]
        %v1737 = vld [vmem:[%s664 + $0x10] sm:$0xf]
        %v1738 = vld [vmem:[%s664 + $0x14] sm:$0xf]
        %v1739 = vld [vmem:[%s664 + $0x18] sm:$0xf]
        %v1740 = vld [vmem:[%s664 + $0x1c] sm:$0xf]
        %v1741 = vld [vmem:[%s664 + $0x20] sm:$0xf]
        %v1742 = vld [vmem:[%s664 + $0x24] sm:$0xf]
        %v1743 = vld [vmem:[%s664 + $0x28] sm:$0xf]
        %v1744 = vld [vmem:[%s664 + $0x2c] sm:$0xf]
        %v1745 = vld [vmem:[%s664 + $0x30] sm:$0xf]
        %v1746 = vld [vmem:[%s664 + $0x34] sm:$0xf]
        %v1747 = vld [vmem:[%s664 + $0x38] sm:$0xf]
        %v1748 = vld [vmem:[%s664 + $0x3c] sm:$0xf]
        %v1749 = vpack.c.bf16 %v1732, %v1732
        %v1750 = vld [vmem:[%s779] sm:$0x1]
        %v1752 = vlaneseq
        %v1753 = vshrl.u32 %v1752, 7
        %v1754 = vsub.s32 0, %v1753
        %v1755 = vrot.slane %v1750, %v1754
        %v1773 = vunpack.c.l.b16 %v1733
        %v1774 = vunpack.c.l.b16 %v1734
        %v1775 = vunpack.c.l.b16 %v1735
        %v1776 = vunpack.c.l.b16 %v1736
        %v1777 = vunpack.c.l.b16 %v1737
        %v1778 = vunpack.c.l.b16 %v1738
        %v1779 = vunpack.c.l.b16 %v1739
        %v1780 = vunpack.c.l.b16 %v1740
        %v1781 = vunpack.c.l.b16 %v1741
        %v1782 = vunpack.c.l.b16 %v1742
        %v1783 = vunpack.c.l.b16 %v1743
        %v1784 = vunpack.c.l.b16 %v1744
        %v1785 = vunpack.c.l.b16 %v1745
        %v1786 = vunpack.c.l.b16 %v1746
        %v1787 = vunpack.c.l.b16 %v1747
        %v1788 = vunpack.c.l.b16 %v1748
        %v1789 = vpack.c.b16 %v1774, %v1773
        %v1790 = vpack.c.b16 %v1776, %v1775
        %v1791 = vpack.c.b16 %v1778, %v1777
        %v1792 = vpack.c.b16 %v1780, %v1779
        %v1793 = vpack.c.b16 %v1782, %v1781
        %v1794 = vpack.c.b16 %v1784, %v1783
        %v1795 = vpack.c.b16 %v1786, %v1785
        %v1796 = vpack.c.b16 %v1788, %v1787
        %1805 = vmatprep.subr.bf16.mxu0 0
        %1806 = vmatpush1.bf16.msra.mxu0 %v1796
        %1807 = vmatprep.subr.bf16.mxu0 0
        %1808 = vmatpush1.bf16.msra.mxu0 %v1795
        %1809 = vmatprep.subr.bf16.mxu0 0
        %1810 = vmatpush1.bf16.msra.mxu0 %v1794
        %1811 = vmatprep.subr.bf16.mxu0 0
        %1812 = vmatpush1.bf16.msra.mxu0 %v1793
        %1813 = vmatprep.subr.bf16.mxu0 0
        %1814 = vmatpush1.bf16.msra.mxu0 %v1792
        %1815 = vmatprep.subr.bf16.mxu0 0
        %1816 = vmatpush1.bf16.msra.mxu0 %v1791
        %1817 = vmatprep.subr.bf16.mxu0 0
        %1818 = vmatpush1.bf16.msra.mxu0 %v1790
        %1819 = vmatprep.subr.bf16.mxu0 0
        %1820 = vmatpush1.bf16.msra.mxu0 %v1789
        %1821 = vmatprep.subr.bf16.mxu0 0
        %1822 = vmatpush2.bf16.msra.mxu0 0
        %1823 = vmatprep.subr.bf16.mxu0 0
        %1824 = vmatpush2.bf16.msra.mxu0 0
        %1825 = vmatprep.subr.bf16.mxu0 0
        %1826 = vmatpush2.bf16.msra.mxu0 0
        %1827 = vmatprep.subr.bf16.mxu0 0
        %1828 = vmatpush2.bf16.msra.mxu0 0
        %1829 = vmatprep.subr.bf16.mxu0 0
        %1830 = vmatpush2.bf16.msra.mxu0 0
        %1831 = vmatprep.subr.bf16.mxu0 0
        %1832 = vmatpush2.bf16.msra.mxu0 0
        %1833 = vmatprep.subr.bf16.mxu0 0
        %1834 = vmatpush2.bf16.msra.mxu0 0
        %1835 = vmatprep.subr.bf16.mxu0 0
        %1836 = vmatpush2.bf16.msra.mxu0 0
        %1837 = vmatprep.mubr.bf16.mxu0 0
        %1838 = vmatmul.mubr.bf16.gmra.mxu0 %v1749
        %v1839 = vpop.f32.mrf.mxu0
        %v1840 = vadd.f32 %v1755, %v1839
        %v1841 = vpop.f32.mrf.mxu0
        %v1842 = vpop.f32.mrf.mxu0
        %v1843 = vpop.f32.mrf.mxu0
        %1844 = vdwg.mxu0
        %v1845 = vmax.f32 %v1840, 0.0
        %1846 = vst [vmem:[%s15] sm:$0xff] %v1845
        %1847 = vrot.lane.b32.xlu0 %v823, 32
        %v1848 = vpop.permute.xlu0 %1847
        %1849 = vrot.lane.b32.xlu0 %v824, 32
        %v1850 = vpop.permute.xlu0 %1849
        %1851 = vrot.lane.b32.xlu0 %v825, 32
        %v1852 = vpop.permute.xlu0 %1851
        %1853 = vrot.lane.b32.xlu0 %v826, 32
        %v1854 = vpop.permute.xlu0 %1853
        %1855 = vrot.lane.b32.xlu0 %v827, 32
        %v1856 = vpop.permute.xlu0 %1855
        %1857 = vrot.lane.b32.xlu0 %v828, 32
        %v1858 = vpop.permute.xlu0 %1857
        %1859 = vrot.lane.b32.xlu0 %v829, 32
        %v1860 = vpop.permute.xlu0 %1859
        %1861 = vrot.lane.b32.xlu0 %v830, 32
        %v1862 = vpop.permute.xlu0 %1861
        %1863 = vrot.lane.b32.xlu0 %v831, 32
        %v1864 = vpop.permute.xlu0 %1863
        %1865 = vrot.lane.b32.xlu0 %v832, 32
        %v1866 = vpop.permute.xlu0 %1865
        %1867 = vrot.lane.b32.xlu0 %v833, 32
        %v1868 = vpop.permute.xlu0 %1867
        %1869 = vrot.lane.b32.xlu0 %v834, 32
        %v1870 = vpop.permute.xlu0 %1869
        %1871 = vrot.lane.b32.xlu0 %v835, 32
        %v1872 = vpop.permute.xlu0 %1871
        %1873 = vrot.lane.b32.xlu0 %v836, 32
        %v1874 = vpop.permute.xlu0 %1873
        %1875 = vrot.lane.b32.xlu0 %v837, 32
        %v1876 = vpop.permute.xlu0 %1875
        %1877 = vrot.lane.b32.xlu0 %v838, 32
        %v1878 = vpop.permute.xlu0 %1877
        %v1879 = vadd.f32 %v1714, %v1848
        %v1880 = vadd.f32 %v1715, %v1850
        %v1881 = vadd.f32 %v1716, %v1852
        %v1882 = vadd.f32 %v1717, %v1854
        %v1883 = vadd.f32 %v1718, %v1856
        %v1884 = vadd.f32 %v1719, %v1858
        %v1885 = vadd.f32 %v1720, %v1860
        %v1886 = vadd.f32 %v1721, %v1862
        %v1887 = vadd.f32 %v1722, %v1864
        %v1888 = vadd.f32 %v1723, %v1866
        %v1889 = vadd.f32 %v1724, %v1868
        %v1890 = vadd.f32 %v1725, %v1870
        %v1891 = vadd.f32 %v1726, %v1872
        %v1892 = vadd.f32 %v1727, %v1874
        %v1893 = vadd.f32 %v1728, %v1876
        %v1894 = vadd.f32 %v1729, %v1878
        %v1895 = vld [vmem:[%s673] sm:$0xf]
        %v1896 = vld [vmem:[%s673 + $0x4] sm:$0xf]
        %v1897 = vld [vmem:[%s673 + $0x8] sm:$0xf]
        %v1898 = vld [vmem:[%s673 + $0xc] sm:$0xf]
        %v1899 = vld [vmem:[%s673 + $0x10] sm:$0xf]
        %v1900 = vld [vmem:[%s673 + $0x14] sm:$0xf]
        %v1901 = vld [vmem:[%s673 + $0x18] sm:$0xf]
        %v1902 = vld [vmem:[%s673 + $0x1c] sm:$0xf]
        %v1903 = vld [vmem:[%s673 + $0x20] sm:$0xf]
        %v1904 = vld [vmem:[%s673 + $0x24] sm:$0xf]
        %v1905 = vld [vmem:[%s673 + $0x28] sm:$0xf]
        %v1906 = vld [vmem:[%s673 + $0x2c] sm:$0xf]
        %v1907 = vld [vmem:[%s673 + $0x30] sm:$0xf]
        %v1908 = vld [vmem:[%s673 + $0x34] sm:$0xf]
        %v1909 = vld [vmem:[%s673 + $0x38] sm:$0xf]
        %v1910 = vld [vmem:[%s673 + $0x3c] sm:$0xf]
        %v1911 = vpack.c.bf16 %v1880, %v1879
        %v1912 = vpack.c.bf16 %v1882, %v1881
        %v1913 = vpack.c.bf16 %v1884, %v1883
        %v1914 = vpack.c.bf16 %v1886, %v1885
        %v1915 = vpack.c.bf16 %v1888, %v1887
        %v1916 = vpack.c.bf16 %v1890, %v1889
        %v1917 = vpack.c.bf16 %v1892, %v1891
        %v1918 = vpack.c.bf16 %v1894, %v1893
        %v1919 = vld [vmem:[%s782] sm:$0x1]
        %v1921 = vlaneseq
        %v1922 = vshrl.u32 %v1921, 7
        %v1923 = vsub.s32 0, %v1922
        %v1924 = vrot.slane %v1919, %v1923
        %v1942 = vunpack.c.l.b16 %v1895
        %v1943 = vunpack.c.l.b16 %v1896
        %v1944 = vunpack.c.l.b16 %v1897
        %v1945 = vunpack.c.l.b16 %v1898
        %v1946 = vunpack.c.l.b16 %v1899
        %v1947 = vunpack.c.l.b16 %v1900
        %v1948 = vunpack.c.l.b16 %v1901
        %v1949 = vunpack.c.l.b16 %v1902
        %v1950 = vunpack.c.l.b16 %v1903
        %v1951 = vunpack.c.l.b16 %v1904
        %v1952 = vunpack.c.l.b16 %v1905
        %v1953 = vunpack.c.l.b16 %v1906
        %v1954 = vunpack.c.l.b16 %v1907
        %v1955 = vunpack.c.l.b16 %v1908
        %v1956 = vunpack.c.l.b16 %v1909
        %v1957 = vunpack.c.l.b16 %v1910
        %v1958 = vpack.c.b16 %v1943, %v1942
        %v1959 = vpack.c.b16 %v1945, %v1944
        %v1960 = vpack.c.b16 %v1947, %v1946
        %v1961 = vpack.c.b16 %v1949, %v1948
        %v1962 = vpack.c.b16 %v1951, %v1950
        %v1963 = vpack.c.b16 %v1953, %v1952
        %v1964 = vpack.c.b16 %v1955, %v1954
        %v1965 = vpack.c.b16 %v1957, %v1956
        %1974 = vmatprep.subr.bf16.mxu0 0
        %1975 = vmatpush1.bf16.msra.mxu0 %v1965
        %1976 = vmatprep.subr.bf16.mxu0 0
        %1977 = vmatpush1.bf16.msra.mxu0 %v1964
        %1978 = vmatprep.subr.bf16.mxu0 0
        %1979 = vmatpush1.bf16.msra.mxu0 %v1963
        %1980 = vmatprep.subr.bf16.mxu0 0
        %1981 = vmatpush1.bf16.msra.mxu0 %v1962
        %1982 = vmatprep.subr.bf16.mxu0 0
        %1983 = vmatpush1.bf16.msra.mxu0 %v1961
        %1984 = vmatprep.subr.bf16.mxu0 0
        %1985 = vmatpush1.bf16.msra.mxu0 %v1960
        %1986 = vmatprep.subr.bf16.mxu0 0
        %1987 = vmatpush1.bf16.msra.mxu0 %v1959
        %1988 = vmatprep.subr.bf16.mxu0 0
        %1989 = vmatpush1.bf16.msra.mxu0 %v1958
        %1990 = vmatprep.subr.bf16.mxu0 0
        %1991 = vmatpush2.bf16.msra.mxu0 0
        %1992 = vmatprep.subr.bf16.mxu0 0
        %1993 = vmatpush2.bf16.msra.mxu0 0
        %1994 = vmatprep.subr.bf16.mxu0 0
        %1995 = vmatpush2.bf16.msra.mxu0 0
        %1996 = vmatprep.subr.bf16.mxu0 0
        %1997 = vmatpush2.bf16.msra.mxu0 0
        %1998 = vmatprep.subr.bf16.mxu0 0
        %1999 = vmatpush2.bf16.msra.mxu0 0
        %2000 = vmatprep.subr.bf16.mxu0 0
        %2001 = vmatpush2.bf16.msra.mxu0 0
        %2002 = vmatprep.subr.bf16.mxu0 0
        %2003 = vmatpush2.bf16.msra.mxu0 0
        %2004 = vmatprep.subr.bf16.mxu0 0
        %2005 = vmatpush2.bf16.msra.mxu0 0
        %2006 = vmatprep.mubr.bf16.mxu0 0
        %2007 = vmatmul.mubr.bf16.gmra.mxu0 %v1911
        %v2008 = vpop.f32.mrf.mxu0
        %v2009 = vadd.f32 %v1924, %v2008
        %v2010 = vpop.f32.mrf.mxu0
        %v2011 = vpop.f32.mrf.mxu0
        %v2012 = vadd.f32 %v1924, %v2011
        %v2013 = vpop.f32.mrf.mxu0
        %2014 = vmatprep.mubr.bf16.mxu0 0
        %2015 = vmatmul.mubr.bf16.gmra.mxu0 %v1912
        %v2016 = vpop.f32.mrf.mxu0
        %v2017 = vadd.f32 %v1924, %v2016
        %v2018 = vpop.f32.mrf.mxu0
        %v2019 = vpop.f32.mrf.mxu0
        %v2020 = vadd.f32 %v1924, %v2019
        %v2021 = vpop.f32.mrf.mxu0
        %2022 = vmatprep.mubr.bf16.mxu0 0
        %2023 = vmatmul.mubr.bf16.gmra.mxu0 %v1913
        %v2024 = vpop.f32.mrf.mxu0
        %v2025 = vadd.f32 %v1924, %v2024
        %v2026 = vpop.f32.mrf.mxu0
        %v2027 = vpop.f32.mrf.mxu0
        %v2028 = vadd.f32 %v1924, %v2027
        %v2029 = vpop.f32.mrf.mxu0
        %2030 = vmatprep.mubr.bf16.mxu0 0
        %2031 = vmatmul.mubr.bf16.gmra.mxu0 %v1914
        %v2032 = vpop.f32.mrf.mxu0
        %v2033 = vadd.f32 %v1924, %v2032
        %v2034 = vpop.f32.mrf.mxu0
        %v2035 = vpop.f32.mrf.mxu0
        %v2036 = vadd.f32 %v1924, %v2035
        %v2037 = vpop.f32.mrf.mxu0
        %2038 = vmatprep.mubr.bf16.mxu0 0
        %2039 = vmatmul.mubr.bf16.gmra.mxu0 %v1915
        %v2040 = vpop.f32.mrf.mxu0
        %v2041 = vadd.f32 %v1924, %v2040
        %v2042 = vpop.f32.mrf.mxu0
        %v2043 = vpop.f32.mrf.mxu0
        %v2044 = vadd.f32 %v1924, %v2043
        %v2045 = vpop.f32.mrf.mxu0
        %2046 = vmatprep.mubr.bf16.mxu0 0
        %2047 = vmatmul.mubr.bf16.gmra.mxu0 %v1916
        %v2048 = vpop.f32.mrf.mxu0
        %v2049 = vadd.f32 %v1924, %v2048
        %v2050 = vpop.f32.mrf.mxu0
        %v2051 = vpop.f32.mrf.mxu0
        %v2052 = vadd.f32 %v1924, %v2051
        %v2053 = vpop.f32.mrf.mxu0
        %2054 = vmatprep.mubr.bf16.mxu0 0
        %2055 = vmatmul.mubr.bf16.gmra.mxu0 %v1917
        %v2056 = vpop.f32.mrf.mxu0
        %v2057 = vadd.f32 %v1924, %v2056
        %v2058 = vpop.f32.mrf.mxu0
        %v2059 = vpop.f32.mrf.mxu0
        %v2060 = vadd.f32 %v1924, %v2059
        %v2061 = vpop.f32.mrf.mxu0
        %2062 = vmatprep.mubr.bf16.mxu0 0
        %2063 = vmatmul.mubr.bf16.gmra.mxu0 %v1918
        %v2064 = vpop.f32.mrf.mxu0
        %v2065 = vadd.f32 %v1924, %v2064
        %v2066 = vpop.f32.mrf.mxu0
        %v2067 = vpop.f32.mrf.mxu0
        %v2068 = vadd.f32 %v1924, %v2067
        %v2069 = vpop.f32.mrf.mxu0
        %2070 = vdwg.mxu0
        %v2071 = vmax.f32 %v2009, 0.0
        %v2072 = vmax.f32 %v2012, 0.0
        %v2073 = vmax.f32 %v2017, 0.0
        %v2074 = vmax.f32 %v2020, 0.0
        %v2075 = vmax.f32 %v2025, 0.0
        %v2076 = vmax.f32 %v2028, 0.0
        %v2077 = vmax.f32 %v2033, 0.0
        %v2078 = vmax.f32 %v2036, 0.0
        %v2079 = vmax.f32 %v2041, 0.0
        %v2080 = vmax.f32 %v2044, 0.0
        %v2081 = vmax.f32 %v2049, 0.0
        %v2082 = vmax.f32 %v2052, 0.0
        %v2083 = vmax.f32 %v2057, 0.0
        %v2084 = vmax.f32 %v2060, 0.0
        %v2085 = vmax.f32 %v2065, 0.0
        %v2086 = vmax.f32 %v2068, 0.0
        %2087 = vst [vmem:[%s16] sm:$0xff] %v2071
        %2088 = vst [vmem:[%s16 + $0x8] sm:$0xff] %v2072
        %2089 = vst [vmem:[%s16 + $0x10] sm:$0xff] %v2073
        %2090 = vst [vmem:[%s16 + $0x18] sm:$0xff] %v2074
        %2091 = vst [vmem:[%s16 + $0x20] sm:$0xff] %v2075
        %2092 = vst [vmem:[%s16 + $0x28] sm:$0xff] %v2076
        %2093 = vst [vmem:[%s16 + $0x30] sm:$0xff] %v2077
        %2094 = vst [vmem:[%s16 + $0x38] sm:$0xff] %v2078
        %2095 = vst [vmem:[%s16 + $0x40] sm:$0xff] %v2079
        %2096 = vst [vmem:[%s16 + $0x48] sm:$0xff] %v2080
        %2097 = vst [vmem:[%s16 + $0x50] sm:$0xff] %v2081
        %2098 = vst [vmem:[%s16 + $0x58] sm:$0xff] %v2082
        %2099 = vst [vmem:[%s16 + $0x60] sm:$0xff] %v2083
        %2100 = vst [vmem:[%s16 + $0x68] sm:$0xff] %v2084
        %2101 = vst [vmem:[%s16 + $0x70] sm:$0xff] %v2085
        %2102 = vst [vmem:[%s16 + $0x78] sm:$0xff] %v2086
        // Predicated region
        $region105: #{gnn_forward.1} parent=79 // pred_check
          %p2103 = pneg %p425
        $region106: #{gnn_forward.1} parent=79 // pred_check_branch
          %2105 = sbr.rel (%p2103) target = $region108
        $region107: #{gnn_forward.1} parent=79 // pred_region
          _
        $region108: #{gnn_forward.1} parent=79 // pred_fallthru
          _
        // Predicated region
        $region109: #{gnn_forward.1} parent=79 // pred_check
          %p2106 = pneg %p446
        $region110: #{gnn_forward.1} parent=79 // pred_check_branch
          %2108 = sbr.rel (%p2106) target = $region112
        $region111: #{gnn_forward.1} parent=79 // pred_region
          _
        $region112: #{gnn_forward.1} parent=79 // pred_fallthru
          _
        // Predicated region
        $region113: #{gnn_forward.1} parent=79 // pred_check
          %p2109 = pneg %p425
        $region114: #{gnn_forward.1} parent=79 // pred_check_branch
          %2111 = sbr.rel (%p2109) target = $region116
        $region115: #{gnn_forward.1} parent=79 // pred_region
          _
        $region116: #{gnn_forward.1} parent=79 // pred_fallthru
          _
        // Predicated region
        $region117: #{gnn_forward.1} parent=79 // pred_check
          %p2112 = pneg %p446
        $region118: #{gnn_forward.1} parent=79 // pred_check_branch
          %2114 = sbr.rel (%p2112) target = $region120
        $region119: #{gnn_forward.1} parent=79 // pred_region
          _
        $region120: #{gnn_forward.1} parent=79 // pred_fallthru
          _
      $region80: #{gnn_forward.1} parent=5 // pred_fallthru
        _
      %p2115 = scmp.le.s32.totalorder 2, %s32
      // Predicated region
      $region121: #{gnn_forward.1} parent=5 // pred_check
        %p2116 = pneg %p2115
      $region122: #{gnn_forward.1} parent=5 // pred_check_branch
        %2118 = sbr.rel (%p2116) target = $region124
      $region123: #{gnn_forward.1} parent=5 // pred_region
        %s2119 = ssub.s32 %s32, 2
      $region124: #{gnn_forward.1} parent=5 // pred_fallthru
        _
    $region6: #{gnn_forward.1} parent=1 // loop_footer
      %s36 = sadd.s32 1, %s32
    $region7: #{gnn_forward.1} parent=1 // loop_footer_branch
      %31 = sbr.rel target = $region3
    $region8: #{gnn_forward.1} parent=1 // loop_exit
      _
    %2120 = vsyncpa [#allocation3], 1
    %s2121 = scalar_lea.sflag [#allocation3], 1
    %2122 = vsyncpa %s2121, 1
    %2123 = vsyncpa [#allocation5], 1
    %s2124 = scalar_lea.sflag [#allocation5], 1
    %2125 = vsyncpa %s2124, 1
    %2126 = vsyncpa [#allocation8], 1
    %s2127 = scalar_lea.sflag [#allocation8], 1
    %2128 = vsyncpa %s2127, 1

</llo_original>
